<compile_context>
chip_gen: v6e
topology: v6e:2x2x1
jax: 0.10.0
libtpu: 0.0.40
codegen_flags: <defaults>
</compile_context>

<pallas_src>
import functools

import jax
import jax.numpy as jnp
from jax.experimental import pallas as pl
from jax.experimental.pallas import tpu as pltpu


def _silu(v):
    # SiLU in f32 (exp + divide hit the EUP, essentially free slots).
    return v * (1.0 / (1.0 + jnp.exp(-v)))


# ----------------------------------------------------------------------------
# Fused kernel:  depthwise conv + BN + SiLU  ->  1x1 conv + BN + SiLU
# ----------------------------------------------------------------------------
def _dwconv_fused_kernel(x_ref, wd_ref, bd_ref, wp_ref, bp_ref, o_ref, *,
                         ksize, stride, tile_ho, wo):
    """Shapes seen by the kernel (batch dim squeezed by the BlockSpec):
         x_ref : (Hp, Wp, Cin)      bf16  whole padded image of one batch elem
         wd_ref: (ks*ks, 1, Cin)    f32   depthwise taps, BN scale folded in
         bd_ref: (1, 1, Cin)        f32   depthwise BN bias
         wp_ref: (Cin, Cout)        bf16  pointwise weight, BN scale folded in
         bp_ref: (1, Cout)          f32   pointwise BN bias
         o_ref : (tile_ho, Wo, Cout) f32
    """
    cin = x_ref.shape[-1]
    cout = o_ref.shape[-1]

    i = pl.program_id(1)
    h0 = pl.multiple_of(i * (tile_ho * stride), tile_ho * stride)

    # ---- depthwise conv: accumulate shifted taps in-kernel (no im2col) ----
    wd = wd_ref[...]                                       # (ks*ks, 1, Cin) f32
    acc = jnp.zeros((tile_ho, wo, cin), jnp.float32)
    for kh in range(ksize):
        for kw in range(ksize):
            t = kh * ksize + kw
            if stride == 1:
                xs = x_ref[pl.ds(h0 + kh, tile_ho), pl.ds(kw, wo), :]
            else:  # strided taps (not exercised by the demo below)
                xs = x_ref[pl.ds(h0 + kh, tile_ho, stride),
                           pl.ds(kw, wo, stride), :]
            acc = acc + xs.astype(jnp.float32) * wd[t:t + 1]   # (1,1,Cin) bcast

    y = _silu(acc + bd_ref[...])                           # BN bias + SiLU, f32

    # ---- pointwise 1x1 conv on the MXU (bf16 inputs, f32 accumulation) ----
    y2 = y.reshape(tile_ho * wo, cin).astype(jnp.bfloat16)
    z = jnp.dot(y2, wp_ref[...], preferred_element_type=jnp.float32)
    z = _silu(z + bp_ref[...])                             # BN bias + SiLU, f32

    o_ref[...] = z.reshape(tile_ho, wo, cout).astype(o_ref.dtype)


# ----------------------------------------------------------------------------
# Wrapper
# ----------------------------------------------------------------------------
def dwconv_forward(x_nchw, params):
    """DWConv forward: x (N, Cin, H, W) f32 NCHW -> (N, Cout, Ho, Wo) f32."""
    ksize, stride = params['ksize'], params['stride']
    pad = (ksize - 1) // 2
    n, cin, h, w = x_nchw.shape
    cout = params['wp'].shape[-1]
    ho = (h + 2 * pad - ksize) // stride + 1
    wo = (w + 2 * pad - ksize) // stride + 1

    # NHWC, bf16 storage (halves HBM traffic; all accumulation stays f32).
    x = jnp.transpose(x_nchw, (0, 2, 3, 1)).astype(jnp.bfloat16)

    # Row tiling: target ~1024 pointwise-matmul rows per grid step (amortizes
    # the ~0.35us/step overhead); cdiv + padding instead of divisibility asserts.
    tile_ho = max(1, min(ho, 1024 // max(wo, 1)))
    n_tiles = pl.cdiv(ho, tile_ho)
    ho_pad = n_tiles * tile_ho

    # Spatial zero padding: conv halo plus extra bottom rows so every row
    # tile's taps stay in-bounds (padded output rows are sliced off below).
    h_in_needed = (ho_pad - 1) * stride + ksize
    pad_bottom = max(0, h_in_needed - h - pad)
    x_p = jnp.pad(x, ((0, 0), (pad, pad_bottom), (pad, pad), (0, 0)))
    hp, wpad = int(x_p.shape[1]), int(x_p.shape[2])

    # Explicit VMEM budget, sized so double-buffering also fits v7x (64 MiB).
    x_blk = hp * wpad * cin * 2
    o_blk = tile_ho * wo * cout * 4
    w_bytes = ksize * ksize * cin * 4 + cin * 4 + cin * cout * 2 + cout * 4
    vmem_limit = int(min(max(2 * (x_blk + o_blk) + 2 * w_bytes + (4 << 20),
                             32 << 20), 48 << 20))

    kernel = functools.partial(_dwconv_fused_kernel, ksize=ksize, stride=stride,
                               tile_ho=tile_ho, wo=wo)
    out = pl.pallas_call(
        kernel,
        out_shape=jax.ShapeDtypeStruct((n, ho_pad, wo, cout), jnp.float32),
        grid=(n, n_tiles),
        in_specs=[
            # Whole padded image per batch element; index_map ignores the row
            # tile index -> no re-DMA across row tiles of the same image.
            pl.BlockSpec((None, hp, wpad, cin), lambda b, i: (b, 0, 0, 0)),
            pl.BlockSpec((ksize * ksize, 1, cin), lambda b, i: (0, 0, 0)),
            pl.BlockSpec((1, 1, cin), lambda b, i: (0, 0, 0)),
            pl.BlockSpec((cin, cout), lambda b, i: (0, 0)),
            pl.BlockSpec((1, cout), lambda b, i: (0, 0)),
        ],
        out_specs=pl.BlockSpec((None, tile_ho, wo, cout),
                               lambda b, i: (b, i, 0, 0)),
        compiler_params=pltpu.CompilerParams(
            dimension_semantics=("parallel", "arbitrary"),
            vmem_limit_bytes=vmem_limit),
    )(x_p, params['wd'], params['bd'], params['wp'], params['bp'])

    out = out[:, :ho]                                   # drop padded rows
    return jnp.transpose(out, (0, 3, 1, 2))             # back to NCHW


# ----------------------------------------------------------------------------
# Parameters (deterministic synthetic init; eval-mode BN folded to scale/bias)
# ----------------------------------------------------------------------------
def _fold_bn(key, c):
    kg, kb, km, kv = jax.random.split(key, 4)
    gamma = 1.0 + 0.1 * jax.random.normal(kg, (c,), jnp.float32)
    beta = 0.1 * jax.random.normal(kb, (c,), jnp.float32)
    mean = 0.1 * jax.random.normal(km, (c,), jnp.float32)
    var = 0.5 + 0.5 * jnp.abs(jax.random.normal(kv, (c,), jnp.float32))
    scale = gamma * jax.lax.rsqrt(var + 1e-5)
    return scale, beta - mean * scale


def make_dwconv_params(key, cin, cout, ksize, stride):
    kd, kbn1, kp, kbn2 = jax.random.split(key, 4)
    # Depthwise Conv2d(cin, cin, ksize, stride, pad, groups=cin, bias=False)
    bound_d = 1.0 / (ksize * ksize) ** 0.5
    wd_hwc = jax.random.uniform(kd, (ksize, ksize, cin), jnp.float32,
                                -bound_d, bound_d)
    scale_d, bias_d = _fold_bn(kbn1, cin)
    wd = (wd_hwc * scale_d[None, None, :]).reshape(ksize * ksize, 1, cin)

    # Pointwise Conv2d(cin, cout, 1, 1, bias=False)
    bound_p = 1.0 / cin ** 0.5
    wp = jax.random.uniform(kp, (cin, cout), jnp.float32, -bound_p, bound_p)
    scale_p, bias_p = _fold_bn(kbn2, cout)
    wp = (wp * scale_p[None, :]).astype(jnp.bfloat16)

    return dict(ksize=ksize, stride=stride,
                wd=wd, bd=bias_d.reshape(1, 1, cin),
                wp=wp, bp=bias_p.reshape(1, cout))


# ----------------------------------------------------------------------------
# Pure-JAX reference of the identical (bf16-stored, BN-folded) computation
# ----------------------------------------------------------------------------
def dwconv_reference(x_nchw, params):
    ksize, stride = params['ksize'], params['stride']
    pad = (ksize - 1) // 2
    cin = x_nchw.shape[1]
    x = jnp.transpose(x_nchw, (0, 2, 3, 1)).astype(jnp.bfloat16)
    x = x.astype(jnp.float32)
    w_hwio = params['wd'].reshape(ksize, ksize, 1, cin)
    y = jax.lax.conv_general_dilated(
        x, w_hwio, window_strides=(stride, stride),
        padding=[(pad, pad), (pad, pad)],
        dimension_numbers=('NHWC', 'HWIO', 'NHWC'),
        feature_group_count=cin,
        precision=jax.lax.Precision.HIGHEST)
    y = _silu(y + params['bd'][None])
    y = y.astype(jnp.bfloat16).astype(jnp.float32)
    z = jnp.einsum('nhwc,cd->nhwd', y, params['wp'].astype(jnp.float32),
                   precision=jax.lax.Precision.HIGHEST)
    z = _silu(z + params['bp'].reshape(1, 1, 1, -1))
    return jnp.transpose(z, (0, 3, 1, 2))


# ----------------------------------------------------------------------------
if __name__ == "__main__":
    key = jax.random.PRNGKey(0)
    k_params, k_x = jax.random.split(key)

    B, Cin, Cout, H, W = 2, 32, 64, 16, 16
    ksize, stride = 3, 1

    x = jax.random.normal(k_x, (B, Cin, H, W), jnp.float32)
    params = make_dwconv_params(k_params, Cin, Cout, ksize, stride)

    out = jax.block_until_ready(dwconv_forward(x, params))
    assert out.shape == (B, Cout, H, W), out.shape

    ref = jax.block_until_ready(dwconv_reference(x, params))
    max_err = float(jnp.max(jnp.abs(out - ref)))
    assert jnp.allclose(out, ref, atol=1e-2, rtol=1e-2), max_err

    print("KERNEL_OK")
</pallas_src>

<mosaic_0001>
module attributes {stable_mosaic.version = 11 : i64} {
  func.func @_dwconv_fused_kernel(%arg0: i32, %arg1: i32, %arg2: memref<1x18x18x32xbf16, #tpu.memory_space<vmem>>, %arg3: memref<9x1x32xf32, #tpu.memory_space<vmem>>, %arg4: memref<1x1x32xf32, #tpu.memory_space<vmem>>, %arg5: memref<32x64xbf16, #tpu.memory_space<vmem>>, %arg6: memref<1x64xf32, #tpu.memory_space<vmem>>, %arg7: memref<1x16x16x64xf32, #tpu.memory_space<vmem>>) attributes {dimension_semantics = [#tpu.dimension_semantics<parallel>, #tpu.dimension_semantics<arbitrary>], iteration_bounds = array<i64: 2, 1>, scalar_prefetch = 0 : i64, scratch_operands = 0 : i64, tpu.core_type = #tpu.core_type<tc>, window_params = [{transform_indices = @transform_0, window_bounds = array<i64: 1, 18, 18, 32>}, {pipeline_mode = #tpu.pipeline_mode<synchronous>, transform_indices = @transform_1, window_bounds = array<i64: 9, 1, 32>}, {pipeline_mode = #tpu.pipeline_mode<synchronous>, transform_indices = @transform_2, window_bounds = array<i64: 1, 1, 32>}, {pipeline_mode = #tpu.pipeline_mode<synchronous>, transform_indices = @transform_3, window_bounds = array<i64: 32, 64>}, {pipeline_mode = #tpu.pipeline_mode<synchronous>, transform_indices = @transform_4, window_bounds = array<i64: 1, 64>}, {transform_indices = @transform_5, window_bounds = array<i64: 1, 16, 16, 64>}]} {
    %c16_i32 = arith.constant 16 : i32
    %0 = arith.muli %arg1, %c16_i32 : i32
    %1 = tpu.assume_multiple %0, 16 : i32
    %c0 = arith.constant 0 : index
    %c0_0 = arith.constant 0 : index
    %c0_1 = arith.constant 0 : index
    %2 = vector.load %arg3[%c0, %c0_0, %c0_1] : memref<9x1x32xf32, #tpu.memory_space<vmem>>, vector<9x1x32xf32>
    %cst = arith.constant 0.000000e+00 : f32
    %3 = vector.broadcast %cst : f32 to vector<16x16x32xf32>
    %c0_i32 = arith.constant 0 : i32
    %4 = arith.addi %1, %c0_i32 : i32
    %c0_2 = arith.constant 0 : index
    %5 = arith.index_cast %4 : i32 to index
    %c0_3 = arith.constant 0 : index
    %c0_4 = arith.constant 0 : index
    %6 = vector.load %arg2[%c0_2, %5, %c0_3, %c0_4] : memref<1x18x18x32xbf16, #tpu.memory_space<vmem>>, vector<1x16x16x32xbf16>
    %7 = vector.shape_cast %6 : vector<1x16x16x32xbf16> to vector<16x16x32xbf16>
    %8 = arith.extf %7 : vector<16x16x32xbf16> to vector<16x16x32xf32>
    %9 = vector.extract_strided_slice %2 {offsets = [0, 0, 0], sizes = [1, 1, 32], strides = [1, 1, 1]} : vector<9x1x32xf32> to vector<1x1x32xf32>
    %10 = vector.broadcast %9 : vector<1x1x32xf32> to vector<16x16x32xf32>
    %11 = arith.mulf %8, %10 : vector<16x16x32xf32>
    %12 = arith.addf %3, %11 : vector<16x16x32xf32>
    %c0_i32_5 = arith.constant 0 : i32
    %13 = arith.addi %1, %c0_i32_5 : i32
    %c0_6 = arith.constant 0 : index
    %14 = arith.index_cast %13 : i32 to index
    %c1 = arith.constant 1 : index
    %c0_7 = arith.constant 0 : index
    %15 = vector.load %arg2[%c0_6, %14, %c1, %c0_7] : memref<1x18x18x32xbf16, #tpu.memory_space<vmem>>, vector<1x16x16x32xbf16>
    %16 = vector.shape_cast %15 : vector<1x16x16x32xbf16> to vector<16x16x32xbf16>
    %17 = arith.extf %16 : vector<16x16x32xbf16> to vector<16x16x32xf32>
    %18 = vector.extract_strided_slice %2 {offsets = [1, 0, 0], sizes = [1, 1, 32], strides = [1, 1, 1]} : vector<9x1x32xf32> to vector<1x1x32xf32>
    %19 = vector.broadcast %18 : vector<1x1x32xf32> to vector<16x16x32xf32>
    %20 = arith.mulf %17, %19 : vector<16x16x32xf32>
    %21 = arith.addf %12, %20 : vector<16x16x32xf32>
    %c0_i32_8 = arith.constant 0 : i32
    %22 = arith.addi %1, %c0_i32_8 : i32
    %c0_9 = arith.constant 0 : index
    %23 = arith.index_cast %22 : i32 to index
    %c2 = arith.constant 2 : index
    %c0_10 = arith.constant 0 : index
    %24 = vector.load %arg2[%c0_9, %23, %c2, %c0_10] : memref<1x18x18x32xbf16, #tpu.memory_space<vmem>>, vector<1x16x16x32xbf16>
    %25 = vector.shape_cast %24 : vector<1x16x16x32xbf16> to vector<16x16x32xbf16>
    %26 = arith.extf %25 : vector<16x16x32xbf16> to vector<16x16x32xf32>
    %27 = vector.extract_strided_slice %2 {offsets = [2, 0, 0], sizes = [1, 1, 32], strides = [1, 1, 1]} : vector<9x1x32xf32> to vector<1x1x32xf32>
    %28 = vector.broadcast %27 : vector<1x1x32xf32> to vector<16x16x32xf32>
    %29 = arith.mulf %26, %28 : vector<16x16x32xf32>
    %30 = arith.addf %21, %29 : vector<16x16x32xf32>
    %c1_i32 = arith.constant 1 : i32
    %31 = arith.addi %1, %c1_i32 : i32
    %c0_11 = arith.constant 0 : index
    %32 = arith.index_cast %31 : i32 to index
    %c0_12 = arith.constant 0 : index
    %c0_13 = arith.constant 0 : index
    %33 = vector.load %arg2[%c0_11, %32, %c0_12, %c0_13] : memref<1x18x18x32xbf16, #tpu.memory_space<vmem>>, vector<1x16x16x32xbf16>
    %34 = vector.shape_cast %33 : vector<1x16x16x32xbf16> to vector<16x16x32xbf16>
    %35 = arith.extf %34 : vector<16x16x32xbf16> to vector<16x16x32xf32>
    %36 = vector.extract_strided_slice %2 {offsets = [3, 0, 0], sizes = [1, 1, 32], strides = [1, 1, 1]} : vector<9x1x32xf32> to vector<1x1x32xf32>
    %37 = vector.broadcast %36 : vector<1x1x32xf32> to vector<16x16x32xf32>
    %38 = arith.mulf %35, %37 : vector<16x16x32xf32>
    %39 = arith.addf %30, %38 : vector<16x16x32xf32>
    %c1_i32_14 = arith.constant 1 : i32
    %40 = arith.addi %1, %c1_i32_14 : i32
    %c0_15 = arith.constant 0 : index
    %41 = arith.index_cast %40 : i32 to index
    %c1_16 = arith.constant 1 : index
    %c0_17 = arith.constant 0 : index
    %42 = vector.load %arg2[%c0_15, %41, %c1_16, %c0_17] : memref<1x18x18x32xbf16, #tpu.memory_space<vmem>>, vector<1x16x16x32xbf16>
    %43 = vector.shape_cast %42 : vector<1x16x16x32xbf16> to vector<16x16x32xbf16>
    %44 = arith.extf %43 : vector<16x16x32xbf16> to vector<16x16x32xf32>
    %45 = vector.extract_strided_slice %2 {offsets = [4, 0, 0], sizes = [1, 1, 32], strides = [1, 1, 1]} : vector<9x1x32xf32> to vector<1x1x32xf32>
    %46 = vector.broadcast %45 : vector<1x1x32xf32> to vector<16x16x32xf32>
    %47 = arith.mulf %44, %46 : vector<16x16x32xf32>
    %48 = arith.addf %39, %47 : vector<16x16x32xf32>
    %c1_i32_18 = arith.constant 1 : i32
    %49 = arith.addi %1, %c1_i32_18 : i32
    %c0_19 = arith.constant 0 : index
    %50 = arith.index_cast %49 : i32 to index
    %c2_20 = arith.constant 2 : index
    %c0_21 = arith.constant 0 : index
    %51 = vector.load %arg2[%c0_19, %50, %c2_20, %c0_21] : memref<1x18x18x32xbf16, #tpu.memory_space<vmem>>, vector<1x16x16x32xbf16>
    %52 = vector.shape_cast %51 : vector<1x16x16x32xbf16> to vector<16x16x32xbf16>
    %53 = arith.extf %52 : vector<16x16x32xbf16> to vector<16x16x32xf32>
    %54 = vector.extract_strided_slice %2 {offsets = [5, 0, 0], sizes = [1, 1, 32], strides = [1, 1, 1]} : vector<9x1x32xf32> to vector<1x1x32xf32>
    %55 = vector.broadcast %54 : vector<1x1x32xf32> to vector<16x16x32xf32>
    %56 = arith.mulf %53, %55 : vector<16x16x32xf32>
    %57 = arith.addf %48, %56 : vector<16x16x32xf32>
    %c2_i32 = arith.constant 2 : i32
    %58 = arith.addi %1, %c2_i32 : i32
    %c0_22 = arith.constant 0 : index
    %59 = arith.index_cast %58 : i32 to index
    %c0_23 = arith.constant 0 : index
    %c0_24 = arith.constant 0 : index
    %60 = vector.load %arg2[%c0_22, %59, %c0_23, %c0_24] : memref<1x18x18x32xbf16, #tpu.memory_space<vmem>>, vector<1x16x16x32xbf16>
    %61 = vector.shape_cast %60 : vector<1x16x16x32xbf16> to vector<16x16x32xbf16>
    %62 = arith.extf %61 : vector<16x16x32xbf16> to vector<16x16x32xf32>
    %63 = vector.extract_strided_slice %2 {offsets = [6, 0, 0], sizes = [1, 1, 32], strides = [1, 1, 1]} : vector<9x1x32xf32> to vector<1x1x32xf32>
    %64 = vector.broadcast %63 : vector<1x1x32xf32> to vector<16x16x32xf32>
    %65 = arith.mulf %62, %64 : vector<16x16x32xf32>
    %66 = arith.addf %57, %65 : vector<16x16x32xf32>
    %c2_i32_25 = arith.constant 2 : i32
    %67 = arith.addi %1, %c2_i32_25 : i32
    %c0_26 = arith.constant 0 : index
    %68 = arith.index_cast %67 : i32 to index
    %c1_27 = arith.constant 1 : index
    %c0_28 = arith.constant 0 : index
    %69 = vector.load %arg2[%c0_26, %68, %c1_27, %c0_28] : memref<1x18x18x32xbf16, #tpu.memory_space<vmem>>, vector<1x16x16x32xbf16>
    %70 = vector.shape_cast %69 : vector<1x16x16x32xbf16> to vector<16x16x32xbf16>
    %71 = arith.extf %70 : vector<16x16x32xbf16> to vector<16x16x32xf32>
    %72 = vector.extract_strided_slice %2 {offsets = [7, 0, 0], sizes = [1, 1, 32], strides = [1, 1, 1]} : vector<9x1x32xf32> to vector<1x1x32xf32>
    %73 = vector.broadcast %72 : vector<1x1x32xf32> to vector<16x16x32xf32>
    %74 = arith.mulf %71, %73 : vector<16x16x32xf32>
    %75 = arith.addf %66, %74 : vector<16x16x32xf32>
    %c2_i32_29 = arith.constant 2 : i32
    %76 = arith.addi %1, %c2_i32_29 : i32
    %c0_30 = arith.constant 0 : index
    %77 = arith.index_cast %76 : i32 to index
    %c2_31 = arith.constant 2 : index
    %c0_32 = arith.constant 0 : index
    %78 = vector.load %arg2[%c0_30, %77, %c2_31, %c0_32] : memref<1x18x18x32xbf16, #tpu.memory_space<vmem>>, vector<1x16x16x32xbf16>
    %79 = vector.shape_cast %78 : vector<1x16x16x32xbf16> to vector<16x16x32xbf16>
    %80 = arith.extf %79 : vector<16x16x32xbf16> to vector<16x16x32xf32>
    %81 = vector.extract_strided_slice %2 {offsets = [8, 0, 0], sizes = [1, 1, 32], strides = [1, 1, 1]} : vector<9x1x32xf32> to vector<1x1x32xf32>
    %82 = vector.broadcast %81 : vector<1x1x32xf32> to vector<16x16x32xf32>
    %83 = arith.mulf %80, %82 : vector<16x16x32xf32>
    %84 = arith.addf %75, %83 : vector<16x16x32xf32>
    %c0_33 = arith.constant 0 : index
    %c0_34 = arith.constant 0 : index
    %c0_35 = arith.constant 0 : index
    %85 = vector.load %arg4[%c0_33, %c0_34, %c0_35] : memref<1x1x32xf32, #tpu.memory_space<vmem>>, vector<1x1x32xf32>
    %86 = vector.broadcast %85 : vector<1x1x32xf32> to vector<16x16x32xf32>
    %87 = arith.addf %84, %86 : vector<16x16x32xf32>
    %cst_36 = arith.constant 0.000000e+00 : f32
    %88 = vector.broadcast %cst_36 : f32 to vector<16x16x32xf32>
    %89 = arith.subf %88, %87 : vector<16x16x32xf32>
    %90 = math.exp %89 : vector<16x16x32xf32>
    %cst_37 = arith.constant 1.000000e+00 : f32
    %91 = vector.broadcast %cst_37 : f32 to vector<16x16x32xf32>
    %92 = arith.addf %91, %90 : vector<16x16x32xf32>
    %cst_38 = arith.constant 1.000000e+00 : f32
    %93 = vector.broadcast %cst_38 : f32 to vector<16x16x32xf32>
    %94 = arith.divf %93, %92 : vector<16x16x32xf32>
    %95 = arith.mulf %87, %94 : vector<16x16x32xf32>
    %96 = vector.shape_cast %95 : vector<16x16x32xf32> to vector<256x32xf32>
    %97 = arith.truncf %96 : vector<256x32xf32> to vector<256x32xbf16>
    %c0_39 = arith.constant 0 : index
    %c0_40 = arith.constant 0 : index
    %98 = vector.load %arg5[%c0_39, %c0_40] : memref<32x64xbf16, #tpu.memory_space<vmem>>, vector<32x64xbf16>
    %cst_41 = arith.constant dense<0.000000e+00> : vector<256x64xf32>
    %99 = tpu.matmul %97, %98, %cst_41 {dimension_numbers = #tpu.dot_dimension_numbers<[1], [0], [0], [1], [0, 0, 1, 1], [], []>} : vector<256x32xbf16>, vector<32x64xbf16>, vector<256x64xf32> -> vector<256x64xf32>
    %c0_42 = arith.constant 0 : index
    %c0_43 = arith.constant 0 : index
    %100 = vector.load %arg6[%c0_42, %c0_43] : memref<1x64xf32, #tpu.memory_space<vmem>>, vector<1x64xf32>
    %101 = vector.broadcast %100 : vector<1x64xf32> to vector<256x64xf32>
    %102 = arith.addf %99, %101 : vector<256x64xf32>
    %cst_44 = arith.constant 0.000000e+00 : f32
    %103 = vector.broadcast %cst_44 : f32 to vector<256x64xf32>
    %104 = arith.subf %103, %102 : vector<256x64xf32>
    %105 = math.exp %104 : vector<256x64xf32>
    %cst_45 = arith.constant 1.000000e+00 : f32
    %106 = vector.broadcast %cst_45 : f32 to vector<256x64xf32>
    %107 = arith.addf %106, %105 : vector<256x64xf32>
    %cst_46 = arith.constant 1.000000e+00 : f32
    %108 = vector.broadcast %cst_46 : f32 to vector<256x64xf32>
    %109 = arith.divf %108, %107 : vector<256x64xf32>
    %110 = arith.mulf %102, %109 : vector<256x64xf32>
    %111 = vector.shape_cast %110 : vector<256x64xf32> to vector<16x16x64xf32>
    %c0_47 = arith.constant 0 : index
    %c0_48 = arith.constant 0 : index
    %c0_49 = arith.constant 0 : index
    %c0_50 = arith.constant 0 : index
    %112 = vector.load %arg7[%c0_47, %c0_48, %c0_49, %c0_50] : memref<1x16x16x64xf32, #tpu.memory_space<vmem>>, vector<1x16x16x64xf32>
    %113 = vector.shape_cast %112 : vector<1x16x16x64xf32> to vector<16x16x64xf32>
    %114 = vector.shape_cast %111 : vector<16x16x64xf32> to vector<1x16x16x64xf32>
    tpu.vector_store %arg7[%c0_47, %c0_48, %c0_49, %c0_50], %114 {strides = array<i32>} : memref<1x16x16x64xf32, #tpu.memory_space<vmem>>, vector<1x16x16x64xf32>,
    return
  }
  func.func @transform_0(%arg0: i32, %arg1: i32) -> (i32, i32, i32, i32) {
    %c0_i32 = arith.constant 0 : i32
    %c0_i32_0 = arith.constant 0 : i32
    %c0_i32_1 = arith.constant 0 : i32
    %c0_i32_2 = arith.constant 0 : i32
    return %arg0, %c0_i32, %c0_i32_0, %c0_i32_1 : i32, i32, i32, i32
  }
  func.func @transform_1(%arg0: i32, %arg1: i32) -> (i32, i32, i32) {
    %c0_i32 = arith.constant 0 : i32
    %c0_i32_0 = arith.constant 0 : i32
    %c0_i32_1 = arith.constant 0 : i32
    %c0_i32_2 = arith.constant 0 : i32
    return %c0_i32, %c0_i32_0, %c0_i32_1 : i32, i32, i32
  }
  func.func @transform_2(%arg0: i32, %arg1: i32) -> (i32, i32, i32) {
    %c0_i32 = arith.constant 0 : i32
    %c0_i32_0 = arith.constant 0 : i32
    %c0_i32_1 = arith.constant 0 : i32
    %c0_i32_2 = arith.constant 0 : i32
    return %c0_i32, %c0_i32_0, %c0_i32_1 : i32, i32, i32
  }
  func.func @transform_3(%arg0: i32, %arg1: i32) -> (i32, i32) {
    %c0_i32 = arith.constant 0 : i32
    %c0_i32_0 = arith.constant 0 : i32
    %c0_i32_1 = arith.constant 0 : i32
    return %c0_i32, %c0_i32_0 : i32, i32
  }
  func.func @transform_4(%arg0: i32, %arg1: i32) -> (i32, i32) {
    %c0_i32 = arith.constant 0 : i32
    %c0_i32_0 = arith.constant 0 : i32
    %c0_i32_1 = arith.constant 0 : i32
    return %c0_i32, %c0_i32_0 : i32, i32
  }
  func.func @transform_5(%arg0: i32, %arg1: i32) -> (i32, i32, i32, i32) {
    %c0_i32 = arith.constant 0 : i32
    %c0_i32_0 = arith.constant 0 : i32
    %c0_i32_1 = arith.constant 0 : i32
    return %arg0, %arg1, %c0_i32, %c0_i32_0 : i32, i32, i32, i32
  }
}

</mosaic_0001>

<llo_original>
// kernel: tpu_custom_call.1
$region0: #{tpu_custom_call.1}
  #allocation0 [shape = 'u32[]', space=smem, size = 0x4, offset = 0x4, fixed_abs, tag = 'smem constant byte address 0x4 - core index']
  #allocation1 [shape = 'u32[144,128]{1,0:T(1,128)}', space=vmem, size = 0x12000, scoped, tag = 'internal scratch']
  %s0 = inlined_call_operand.vmem [shape: bf16[2,18,18,32], index: 0, kind: input, shape index: {}]
  %s1 = inlined_call_operand.vmem [shape: f32[9,1,32], index: 1, kind: input, shape index: {}]
  %s2 = inlined_call_operand.vmem [shape: f32[1,1,32], index: 2, kind: input, shape index: {}]
  %s3 = inlined_call_operand.vmem [shape: bf16[32,64], index: 3, kind: input, shape index: {}]
  %s4 = inlined_call_operand.vmem [shape: f32[1,64], index: 4, kind: input, shape index: {}]
  %s5 = inlined_call_operand.hbm [shape: f32[2,16,16,64], index: 5, kind: output, shape index: {}]
  %s6 = sld [smem:[#allocation0]]
  $region53: #{tpu_custom_call.1} parent=0
    _
  %s8 = ssub.s32 1, %s6
  %s9 = scalar_select 0, %s8, %s6
  $region1: #{tpu_custom_call.1} parent=0
    #allocation2 [shape = 'u8[262144]{0}', space=vmem, size = 0x40000, scoped, tag = 'output window, operand 0']
    #allocation3 [shape = 's32[2]{0}', space=sflag, size = 0x8, scoped, tag = 'scoped memory for tpu_custom_call.1']
    %10 = vsyncpa [#allocation3], 0
    %s11 = scalar_lea.sflag [#allocation3], 1
    %12 = vsyncpa %s11, 0
    loop: start=0, step=1, limit=4
    $region2: #{tpu_custom_call.1} parent=1 // loop_pre_header
      _
    $region3: #{tpu_custom_call.1} parent=1 // loop_header
      %s14 = sphi 0, %s18
      %p15 = scmp.ge.s32.totalorder %s14, 4
      %s21 = sphi 0, %s33
      %s22 = sphi 0, %s29
      %s23 = sphi 0, %s21
      %s24 = sphi 0, %s22
      %s25 = sphi 0, %s23
      %s26 = sphi 0, %s24
      %s36 = sphi 0, %s38
      %s39 = sphi 0, %s36
      %s40 = sphi 0, %s39
      %s56 = sphi 0, %s40
      %s60 = sphi 0, %s60
      %s62 = sphi 0, %s60
      %s63 = sphi 0, %s62
      %s77 = sphi 0, %s63
      %s81 = sphi 0, %s81
      %s83 = sphi 0, %s81
      %s84 = sphi 0, %s83
      %s98 = sphi 0, %s84
      %s102 = sphi 0, %s102
      %s104 = sphi 0, %s102
      %s105 = sphi 0, %s104
      %s119 = sphi 0, %s105
      %s123 = sphi 0, %s123
      %s125 = sphi 0, %s123
      %s126 = sphi 0, %s125
      %s140 = sphi 0, %s126
      %s148 = sphi 0, %s150
      %s151 = sphi 0, %s148
      %s152 = sphi 0, %s151
      %s168 = sphi 0, %s152
    $region4: #{tpu_custom_call.1} parent=1 // loop_header_branch
      %17 = sbr.rel (%p15) target = $region8
    $region5: #{tpu_custom_call.1} parent=1 // loop_body
      %s19 = ssub.s32 %s14, 1
      %s20 = ssub.s32 %s14, 2
      %s27 = sadd.s32 1, %s22
      %p28 = scmp.ge.s32.totalorder %s27, 1
      %s29 = scalar_select %p28, 0, %s27
      %s30 = sadd.s32 1, %s21
      %s31 = scalar_select %p28, %s30, %s21
      %p32 = scmp.ge.s32.totalorder %s31, 2
      %s33 = scalar_select %p32, 0, %s31
      %s34 = ssub.s32 %s21, %s33
      %p35 = scmp.eq.s32.totalorder %s34, 0
      %s37 = sadd.s32 %s36, 1
      %s38 = scalar_select %p35, %s36, %s37
      %p41 = pneg %p35
      %p42 = scmp.eq.s32.totalorder %s14, 1
      %p43 = por %p41, %p42
      %p44 = scmp.ne.s32.totalorder %s36, %s39
      %p45 = scmp.eq.s32.totalorder %s14, 0
      %p46 = por %p44, %p45
      %p47 = scmp.ne.s32.totalorder %s36, %s39
      %p48 = scmp.eq.s32.totalorder %s19, 1
      %p49 = por %p47, %p48
      %p50 = scmp.ne.s32.totalorder %s39, %s40
      %p51 = scmp.eq.s32.totalorder %s19, 0
      %p52 = por %p50, %p51
      %p53 = scmp.ne.s32.totalorder %s39, %s40
      %p54 = scmp.eq.s32.totalorder %s20, 1
      %p55 = por %p53, %p54
      %p57 = scmp.ne.s32.totalorder %s40, %s56
      %p58 = scmp.eq.s32.totalorder %s20, 0
      %p59 = por %p57, %p58
      %s61 = sadd.s32 %s60, 1
      %p64 = scmp.eq.s32.totalorder %s14, 1
      %p65 = scmp.ne.s32.totalorder %s60, %s62
      %p66 = scmp.eq.s32.totalorder %s14, 0
      %p67 = por %p65, %p66
      %p68 = scmp.ne.s32.totalorder %s60, %s62
      %p69 = scmp.eq.s32.totalorder %s19, 1
      %p70 = por %p68, %p69
      %p71 = scmp.ne.s32.totalorder %s62, %s63
      %p72 = scmp.eq.s32.totalorder %s19, 0
      %p73 = por %p71, %p72
      %p74 = scmp.ne.s32.totalorder %s62, %s63
      %p75 = scmp.eq.s32.totalorder %s20, 1
      %p76 = por %p74, %p75
      %p78 = scmp.ne.s32.totalorder %s63, %s77
      %p79 = scmp.eq.s32.totalorder %s20, 0
      %p80 = por %p78, %p79
      %s82 = sadd.s32 %s81, 1
      %p85 = scmp.eq.s32.totalorder %s14, 1
      %p86 = scmp.ne.s32.totalorder %s81, %s83
      %p87 = scmp.eq.s32.totalorder %s14, 0
      %p88 = por %p86, %p87
      %p89 = scmp.ne.s32.totalorder %s81, %s83
      %p90 = scmp.eq.s32.totalorder %s19, 1
      %p91 = por %p89, %p90
      %p92 = scmp.ne.s32.totalorder %s83, %s84
      %p93 = scmp.eq.s32.totalorder %s19, 0
      %p94 = por %p92, %p93
      %p95 = scmp.ne.s32.totalorder %s83, %s84
      %p96 = scmp.eq.s32.totalorder %s20, 1
      %p97 = por %p95, %p96
      %p99 = scmp.ne.s32.totalorder %s84, %s98
      %p100 = scmp.eq.s32.totalorder %s20, 0
      %p101 = por %p99, %p100
      %s103 = sadd.s32 %s102, 1
      %p106 = scmp.eq.s32.totalorder %s14, 1
      %p107 = scmp.ne.s32.totalorder %s102, %s104
      %p108 = scmp.eq.s32.totalorder %s14, 0
      %p109 = por %p107, %p108
      %p110 = scmp.ne.s32.totalorder %s102, %s104
      %p111 = scmp.eq.s32.totalorder %s19, 1
      %p112 = por %p110, %p111
      %p113 = scmp.ne.s32.totalorder %s104, %s105
      %p114 = scmp.eq.s32.totalorder %s19, 0
      %p115 = por %p113, %p114
      %p116 = scmp.ne.s32.totalorder %s104, %s105
      %p117 = scmp.eq.s32.totalorder %s20, 1
      %p118 = por %p116, %p117
      %p120 = scmp.ne.s32.totalorder %s105, %s119
      %p121 = scmp.eq.s32.totalorder %s20, 0
      %p122 = por %p120, %p121
      %s124 = sadd.s32 %s123, 1
      %p127 = scmp.eq.s32.totalorder %s14, 1
      %p128 = scmp.ne.s32.totalorder %s123, %s125
      %p129 = scmp.eq.s32.totalorder %s14, 0
      %p130 = por %p128, %p129
      %p131 = scmp.ne.s32.totalorder %s123, %s125
      %p132 = scmp.eq.s32.totalorder %s19, 1
      %p133 = por %p131, %p132
      %p134 = scmp.ne.s32.totalorder %s125, %s126
      %p135 = scmp.eq.s32.totalorder %s19, 0
      %p136 = por %p134, %p135
      %p137 = scmp.ne.s32.totalorder %s125, %s126
      %p138 = scmp.eq.s32.totalorder %s20, 1
      %p139 = por %p137, %p138
      %p141 = scmp.ne.s32.totalorder %s126, %s140
      %p142 = scmp.eq.s32.totalorder %s20, 0
      %p143 = por %p141, %p142
      %s144 = ssub.s32 %s21, %s33
      %s145 = ssub.s32 %s22, %s29
      %s146 = sor.u32 %s144, %s145
      %p147 = scmp.eq.s32.totalorder %s146, 0
      %s149 = sadd.s32 %s148, 1
      %s150 = scalar_select %p147, %s148, %s149
      %p153 = pneg %p147
      %p154 = scmp.eq.s32.totalorder %s14, 1
      %p155 = por %p153, %p154
      %p156 = scmp.ne.s32.totalorder %s148, %s151
      %p157 = scmp.eq.s32.totalorder %s14, 0
      %p158 = por %p156, %p157
      %p159 = scmp.ne.s32.totalorder %s148, %s151
      %p160 = scmp.eq.s32.totalorder %s19, 1
      %p161 = por %p159, %p160
      %p162 = scmp.ne.s32.totalorder %s151, %s152
      %p163 = scmp.eq.s32.totalorder %s19, 0
      %p164 = por %p162, %p163
      %p165 = scmp.ne.s32.totalorder %s151, %s152
      %p166 = scmp.eq.s32.totalorder %s20, 1
      %p167 = por %p165, %p166
      %p169 = scmp.ne.s32.totalorder %s152, %s168
      %p170 = scmp.eq.s32.totalorder %s20, 0
      %p171 = por %p169, %p170
      %p172 = scmp.le.s32.totalorder 1, %s14
      %p173 = scmp.lt.s32.totalorder %s14, 3
      %p174 = pnand %p172, %p173
      %p175 = pneg %p174
      // Predicated region
      $region9: #{tpu_custom_call.1} parent=5 // pred_check
        _
      $region10: #{tpu_custom_call.1} parent=5 // pred_check_branch
        %177 = sbr.rel (%p174) target = $region12
      $region11: #{tpu_custom_call.1} parent=5 // pred_region
        %s178 = ssub.s32 %s14, 1
        // Predicated region
        $region13: #{tpu_custom_call.1} parent=11 // pred_check
          %p179 = pneg %p73
        $region14: #{tpu_custom_call.1} parent=11 // pred_check_branch
          %181 = sbr.rel (%p179) target = $region16
        $region15: #{tpu_custom_call.1} parent=11 // pred_region
          _
        $region16: #{tpu_custom_call.1} parent=11 // pred_fallthru
          _
        // Predicated region
        $region17: #{tpu_custom_call.1} parent=11 // pred_check
          %p182 = pneg %p94
        $region18: #{tpu_custom_call.1} parent=11 // pred_check_branch
          %184 = sbr.rel (%p182) target = $region20
        $region19: #{tpu_custom_call.1} parent=11 // pred_region
          _
        $region20: #{tpu_custom_call.1} parent=11 // pred_fallthru
          _
        // Predicated region
        $region21: #{tpu_custom_call.1} parent=11 // pred_check
          %p185 = pneg %p115
        $region22: #{tpu_custom_call.1} parent=11 // pred_check_branch
          %187 = sbr.rel (%p185) target = $region24
        $region23: #{tpu_custom_call.1} parent=11 // pred_region
          _
        $region24: #{tpu_custom_call.1} parent=11 // pred_fallthru
          _
        // Predicated region
        $region25: #{tpu_custom_call.1} parent=11 // pred_check
          %p188 = pneg %p136
        $region26: #{tpu_custom_call.1} parent=11 // pred_check_branch
          %190 = sbr.rel (%p188) target = $region28
        $region27: #{tpu_custom_call.1} parent=11 // pred_region
          _
        $region28: #{tpu_custom_call.1} parent=11 // pred_fallthru
          _
      $region12: #{tpu_custom_call.1} parent=5 // pred_fallthru
        _
      %p191 = scmp.lt.s32.totalorder %s14, 2
      // Predicated region
      $region29: #{tpu_custom_call.1} parent=5 // pred_check
        %p192 = pneg %p191
      $region30: #{tpu_custom_call.1} parent=5 // pred_check_branch
        %194 = sbr.rel (%p192) target = $region32
      $region31: #{tpu_custom_call.1} parent=5 // pred_region
        // Predicated region
        $region33: #{tpu_custom_call.1} parent=31 // pred_check
          %p195 = pneg %p46
        $region34: #{tpu_custom_call.1} parent=31 // pred_check_branch
          %197 = sbr.rel (%p195) target = $region36
        $region35: #{tpu_custom_call.1} parent=31 // pred_region
          %p198 = scmp.lt.s32.totalorder %s21, 1
          %s199 = scalar_select %p198, %s21, 1
          %s200 = smul.addr %s199, 54
          %s201 = smul.addr %s200, 4
          %s202 = scalar_lea.vmem %s0, %s201
        $region36: #{tpu_custom_call.1} parent=31 // pred_fallthru
          _
      $region32: #{tpu_custom_call.1} parent=5 // pred_fallthru
        _
      %p203 = scmp.le.s32.totalorder 1, %s14
      %p204 = scmp.lt.s32.totalorder %s14, 3
      %p205 = pnand %p203, %p204
      %p206 = pneg %p205
      // Predicated region
      $region37: #{tpu_custom_call.1} parent=5 // pred_check
        _
      $region38: #{tpu_custom_call.1} parent=5 // pred_check_branch
        %208 = sbr.rel (%p205) target = $region40
      $region39: #{tpu_custom_call.1} parent=5 // pred_region
        %s209 = ssub.s32 %s14, 1
        %p210 = scmp.lt.s32.totalorder %s23, 1
        %s211 = scalar_select %p210, %s23, 1
        %s212 = smul.addr %s211, 54
        %s213 = smul.addr %s212, 4
        %s214 = scalar_lea.vmem %s0, %s213
        %p215 = pneg %p52
        %p216 = pneg %p49
        %p217 = pneg %p73
        %p218 = pneg %p70
        %p219 = pneg %p94
        %p220 = pneg %p91
        %p221 = pneg %p115
        %p222 = pneg %p112
        %p223 = pneg %p136
        %p224 = pneg %p133
        %p225 = pneg %p164
        %p226 = pneg %p161
        %s227 = sand.u32 %s151, 1
        %s228 = scalar_lea.sflag [#allocation3], %s227
        %s229 = sand.u32 %s151, 1
        %s230 = smul.addr %s229, 256
        %s231 = scalar_lea.vmem [#allocation2], %s230
        %p232 = scmp.lt.s32.totalorder %s23, 1
        %s233 = scalar_select %p232, %s23, 1
        %s234 = smul.addr %s233, 54
        %s235 = smul.addr %s234, 4
        %s236 = scalar_lea.vmem %s0, %s235
        %s237 = smul.u32 16, %s24
        %s239 = smul.u32 %s24, 16
        %v240 = vld [vmem:[%s1] sm:$0x1]
        %v241 = vld [vmem:[%s1 + $0x1] sm:$0x1]
        %v242 = vld [vmem:[%s1 + $0x2] sm:$0x1]
        %v243 = vld [vmem:[%s1 + $0x3] sm:$0x1]
        %v244 = vld [vmem:[%s1 + $0x4] sm:$0x1]
        %v245 = vld [vmem:[%s1 + $0x5] sm:$0x1]
        %v246 = vld [vmem:[%s1 + $0x6] sm:$0x1]
        %v247 = vld [vmem:[%s1 + $0x7] sm:$0x1]
        %v248 = vld [vmem:[%s1 + $0x8] sm:$0x1]
        %s249 = smul.u32 %s239, 3
        %s250 = smul.addr %s249, 4
        %s251 = scalar_lea.vmem %s236, %s250
        %v252 = vld [vmem:[%s251] sm:$0xf]
        %v253 = vld [vmem:[%s251 + $0x4] sm:$0xf]
        %v254 = vld [vmem:[%s251 + $0xc] sm:$0xf]
        %v255 = vld [vmem:[%s251 + $0x10] sm:$0xf]
        %v256 = vld [vmem:[%s251 + $0x18] sm:$0xf]
        %v257 = vld [vmem:[%s251 + $0x1c] sm:$0xf]
        %v258 = vld [vmem:[%s251 + $0x24] sm:$0xf]
        %v259 = vld [vmem:[%s251 + $0x28] sm:$0xf]
        %v260 = vld [vmem:[%s251 + $0x30] sm:$0xf]
        %v261 = vld [vmem:[%s251 + $0x34] sm:$0xf]
        %v262 = vld [vmem:[%s251 + $0x3c] sm:$0xf]
        %v263 = vld [vmem:[%s251 + $0x40] sm:$0xf]
        %v264 = vld [vmem:[%s251 + $0x48] sm:$0xf]
        %v265 = vld [vmem:[%s251 + $0x4c] sm:$0xf]
        %v266 = vld [vmem:[%s251 + $0x54] sm:$0xf]
        %v267 = vld [vmem:[%s251 + $0x58] sm:$0xf]
        %v268 = vld [vmem:[%s251 + $0x60] sm:$0xf]
        %v269 = vld [vmem:[%s251 + $0x64] sm:$0xf]
        %v270 = vld [vmem:[%s251 + $0x6c] sm:$0xf]
        %v271 = vld [vmem:[%s251 + $0x70] sm:$0xf]
        %v272 = vld [vmem:[%s251 + $0x78] sm:$0xf]
        %v273 = vld [vmem:[%s251 + $0x7c] sm:$0xf]
        %v274 = vld [vmem:[%s251 + $0x84] sm:$0xf]
        %v275 = vld [vmem:[%s251 + $0x88] sm:$0xf]
        %v276 = vld [vmem:[%s251 + $0x90] sm:$0xf]
        %v277 = vld [vmem:[%s251 + $0x94] sm:$0xf]
        %v278 = vld [vmem:[%s251 + $0x9c] sm:$0xf]
        %v279 = vld [vmem:[%s251 + $0xa0] sm:$0xf]
        %v280 = vld [vmem:[%s251 + $0xa8] sm:$0xf]
        %v281 = vld [vmem:[%s251 + $0xac] sm:$0xf]
        %v282 = vld [vmem:[%s251 + $0xb4] sm:$0xf]
        %v283 = vld [vmem:[%s251 + $0xb8] sm:$0xf]
        %v284 = vunpack.c.l.bf16 %v252
        %v285 = vunpack.c.l.bf16 %v253
        %v286 = vunpack.c.l.bf16 %v254
        %v287 = vunpack.c.l.bf16 %v255
        %v288 = vunpack.c.l.bf16 %v256
        %v289 = vunpack.c.l.bf16 %v257
        %v290 = vunpack.c.l.bf16 %v258
        %v291 = vunpack.c.l.bf16 %v259
        %v292 = vunpack.c.l.bf16 %v260
        %v293 = vunpack.c.l.bf16 %v261
        %v294 = vunpack.c.l.bf16 %v262
        %v295 = vunpack.c.l.bf16 %v263
        %v296 = vunpack.c.l.bf16 %v264
        %v297 = vunpack.c.l.bf16 %v265
        %v298 = vunpack.c.l.bf16 %v266
        %v299 = vunpack.c.l.bf16 %v267
        %v300 = vunpack.c.l.bf16 %v268
        %v301 = vunpack.c.l.bf16 %v269
        %v302 = vunpack.c.l.bf16 %v270
        %v303 = vunpack.c.l.bf16 %v271
        %v304 = vunpack.c.l.bf16 %v272
        %v305 = vunpack.c.l.bf16 %v273
        %v306 = vunpack.c.l.bf16 %v274
        %v307 = vunpack.c.l.bf16 %v275
        %v308 = vunpack.c.l.bf16 %v276
        %v309 = vunpack.c.l.bf16 %v277
        %v310 = vunpack.c.l.bf16 %v278
        %v311 = vunpack.c.l.bf16 %v279
        %v312 = vunpack.c.l.bf16 %v280
        %v313 = vunpack.c.l.bf16 %v281
        %v314 = vunpack.c.l.bf16 %v282
        %v315 = vunpack.c.l.bf16 %v283
        %v317 = vlaneseq
        %v318 = vshrl.u32 %v317, 7
        %v319 = vsub.s32 0, %v318
        %v320 = vrot.slane %v240, %v319
        %v322 = vmul.f32 %v284, %v320
        %v323 = vmul.f32 %v285, %v320
        %v324 = vmul.f32 %v286, %v320
        %v325 = vmul.f32 %v287, %v320
        %v326 = vmul.f32 %v288, %v320
        %v327 = vmul.f32 %v289, %v320
        %v328 = vmul.f32 %v290, %v320
        %v329 = vmul.f32 %v291, %v320
        %v330 = vmul.f32 %v292, %v320
        %v331 = vmul.f32 %v293, %v320
        %v332 = vmul.f32 %v294, %v320
        %v333 = vmul.f32 %v295, %v320
        %v334 = vmul.f32 %v296, %v320
        %v335 = vmul.f32 %v297, %v320
        %v336 = vmul.f32 %v298, %v320
        %v337 = vmul.f32 %v299, %v320
        %v338 = vmul.f32 %v300, %v320
        %v339 = vmul.f32 %v301, %v320
        %v340 = vmul.f32 %v302, %v320
        %v341 = vmul.f32 %v303, %v320
        %v342 = vmul.f32 %v304, %v320
        %v343 = vmul.f32 %v305, %v320
        %v344 = vmul.f32 %v306, %v320
        %v345 = vmul.f32 %v307, %v320
        %v346 = vmul.f32 %v308, %v320
        %v347 = vmul.f32 %v309, %v320
        %v348 = vmul.f32 %v310, %v320
        %v349 = vmul.f32 %v311, %v320
        %v350 = vmul.f32 %v312, %v320
        %v351 = vmul.f32 %v313, %v320
        %v352 = vmul.f32 %v314, %v320
        %v353 = vmul.f32 %v315, %v320
        %v354 = vadd.f32 %v322, 0.0
        %v355 = vadd.f32 %v323, 0.0
        %v356 = vadd.f32 %v324, 0.0
        %v357 = vadd.f32 %v325, 0.0
        %v358 = vadd.f32 %v326, 0.0
        %v359 = vadd.f32 %v327, 0.0
        %v360 = vadd.f32 %v328, 0.0
        %v361 = vadd.f32 %v329, 0.0
        %v362 = vadd.f32 %v330, 0.0
        %v363 = vadd.f32 %v331, 0.0
        %v364 = vadd.f32 %v332, 0.0
        %v365 = vadd.f32 %v333, 0.0
        %v366 = vadd.f32 %v334, 0.0
        %v367 = vadd.f32 %v335, 0.0
        %v368 = vadd.f32 %v336, 0.0
        %v369 = vadd.f32 %v337, 0.0
        %v370 = vadd.f32 %v338, 0.0
        %v371 = vadd.f32 %v339, 0.0
        %v372 = vadd.f32 %v340, 0.0
        %v373 = vadd.f32 %v341, 0.0
        %v374 = vadd.f32 %v342, 0.0
        %v375 = vadd.f32 %v343, 0.0
        %v376 = vadd.f32 %v344, 0.0
        %v377 = vadd.f32 %v345, 0.0
        %v378 = vadd.f32 %v346, 0.0
        %v379 = vadd.f32 %v347, 0.0
        %v380 = vadd.f32 %v348, 0.0
        %v381 = vadd.f32 %v349, 0.0
        %v382 = vadd.f32 %v350, 0.0
        %v383 = vadd.f32 %v351, 0.0
        %v384 = vadd.f32 %v352, 0.0
        %v385 = vadd.f32 %v353, 0.0
        %v386 = vld [vmem:[%s251 + $0x8] sm:$0x1]
        %v387 = vld [vmem:[%s251 + $0x14] sm:$0x1]
        %v388 = vld [vmem:[%s251 + $0x20] sm:$0x1]
        %v389 = vld [vmem:[%s251 + $0x2c] sm:$0x1]
        %v390 = vld [vmem:[%s251 + $0x38] sm:$0x1]
        %v391 = vld [vmem:[%s251 + $0x44] sm:$0x1]
        %v392 = vld [vmem:[%s251 + $0x50] sm:$0x1]
        %v393 = vld [vmem:[%s251 + $0x5c] sm:$0x1]
        %v394 = vld [vmem:[%s251 + $0x68] sm:$0x1]
        %v395 = vld [vmem:[%s251 + $0x74] sm:$0x1]
        %v396 = vld [vmem:[%s251 + $0x80] sm:$0x1]
        %v397 = vld [vmem:[%s251 + $0x8c] sm:$0x1]
        %v398 = vld [vmem:[%s251 + $0x98] sm:$0x1]
        %v399 = vld [vmem:[%s251 + $0xa4] sm:$0x1]
        %v400 = vld [vmem:[%s251 + $0xb0] sm:$0x1]
        %v401 = vld [vmem:[%s251 + $0xbc] sm:$0x1]
        %v402 = vunpack.c.l.bf16 %v386
        %v403 = vunpack.c.l.bf16 %v387
        %v404 = vunpack.c.l.bf16 %v388
        %v405 = vunpack.c.l.bf16 %v389
        %v406 = vunpack.c.l.bf16 %v390
        %v407 = vunpack.c.l.bf16 %v391
        %v408 = vunpack.c.l.bf16 %v392
        %v409 = vunpack.c.l.bf16 %v393
        %v410 = vunpack.c.l.bf16 %v394
        %v411 = vunpack.c.l.bf16 %v395
        %v412 = vunpack.c.l.bf16 %v396
        %v413 = vunpack.c.l.bf16 %v397
        %v414 = vunpack.c.l.bf16 %v398
        %v415 = vunpack.c.l.bf16 %v399
        %v416 = vunpack.c.l.bf16 %v400
        %v417 = vunpack.c.l.bf16 %v401
        %v419 = vlaneseq
        %v420 = vshrl.u32 %v419, 7
        %v421 = vsub.s32 0, %v420
        %v422 = vrot.slane %v241, %v421
        %v424 = vmul.f32 %v284, %v422
        %v425 = vmul.f32 %v285, %v422
        %v426 = vmul.f32 %v402, %v422
        %v427 = vmul.f32 %v286, %v422
        %v428 = vmul.f32 %v287, %v422
        %v429 = vmul.f32 %v403, %v422
        %v430 = vmul.f32 %v288, %v422
        %v431 = vmul.f32 %v289, %v422
        %v432 = vmul.f32 %v404, %v422
        %v433 = vmul.f32 %v290, %v422
        %v434 = vmul.f32 %v291, %v422
        %v435 = vmul.f32 %v405, %v422
        %v436 = vmul.f32 %v292, %v422
        %v437 = vmul.f32 %v293, %v422
        %v438 = vmul.f32 %v406, %v422
        %v439 = vmul.f32 %v294, %v422
        %v440 = vmul.f32 %v295, %v422
        %v441 = vmul.f32 %v407, %v422
        %v442 = vmul.f32 %v296, %v422
        %v443 = vmul.f32 %v297, %v422
        %v444 = vmul.f32 %v408, %v422
        %v445 = vmul.f32 %v298, %v422
        %v446 = vmul.f32 %v299, %v422
        %v447 = vmul.f32 %v409, %v422
        %v448 = vmul.f32 %v300, %v422
        %v449 = vmul.f32 %v301, %v422
        %v450 = vmul.f32 %v410, %v422
        %v451 = vmul.f32 %v302, %v422
        %v452 = vmul.f32 %v303, %v422
        %v453 = vmul.f32 %v411, %v422
        %v454 = vmul.f32 %v304, %v422
        %v455 = vmul.f32 %v305, %v422
        %v456 = vmul.f32 %v412, %v422
        %v457 = vmul.f32 %v306, %v422
        %v458 = vmul.f32 %v307, %v422
        %v459 = vmul.f32 %v413, %v422
        %v460 = vmul.f32 %v308, %v422
        %v461 = vmul.f32 %v309, %v422
        %v462 = vmul.f32 %v414, %v422
        %v463 = vmul.f32 %v310, %v422
        %v464 = vmul.f32 %v311, %v422
        %v465 = vmul.f32 %v415, %v422
        %v466 = vmul.f32 %v312, %v422
        %v467 = vmul.f32 %v313, %v422
        %v468 = vmul.f32 %v416, %v422
        %v469 = vmul.f32 %v314, %v422
        %v470 = vmul.f32 %v315, %v422
        %v471 = vmul.f32 %v417, %v422
        %vm520 = vcmask 1046528
        %v521 = vrot.slane %v424, 1
        %v522 = vrot.slane %v425, 1
        %v523 = vsel %vm520, %v521, %v522
        %v524 = vrot.slane %v426, 1
        %v525 = vsel %vm520, %v522, %v524
        %v526 = vrot.slane %v427, 1
        %v527 = vrot.slane %v428, 1
        %v528 = vsel %vm520, %v526, %v527
        %v529 = vrot.slane %v429, 1
        %v530 = vsel %vm520, %v527, %v529
        %v531 = vrot.slane %v430, 1
        %v532 = vrot.slane %v431, 1
        %v533 = vsel %vm520, %v531, %v532
        %v534 = vrot.slane %v432, 1
        %v535 = vsel %vm520, %v532, %v534
        %v536 = vrot.slane %v433, 1
        %v537 = vrot.slane %v434, 1
        %v538 = vsel %vm520, %v536, %v537
        %v539 = vrot.slane %v435, 1
        %v540 = vsel %vm520, %v537, %v539
        %v541 = vrot.slane %v436, 1
        %v542 = vrot.slane %v437, 1
        %v543 = vsel %vm520, %v541, %v542
        %v544 = vrot.slane %v438, 1
        %v545 = vsel %vm520, %v542, %v544
        %v546 = vrot.slane %v439, 1
        %v547 = vrot.slane %v440, 1
        %v548 = vsel %vm520, %v546, %v547
        %v549 = vrot.slane %v441, 1
        %v550 = vsel %vm520, %v547, %v549
        %v551 = vrot.slane %v442, 1
        %v552 = vrot.slane %v443, 1
        %v553 = vsel %vm520, %v551, %v552
        %v554 = vrot.slane %v444, 1
        %v555 = vsel %vm520, %v552, %v554
        %v556 = vrot.slane %v445, 1
        %v557 = vrot.slane %v446, 1
        %v558 = vsel %vm520, %v556, %v557
        %v559 = vrot.slane %v447, 1
        %v560 = vsel %vm520, %v557, %v559
        %v561 = vrot.slane %v448, 1
        %v562 = vrot.slane %v449, 1
        %v563 = vsel %vm520, %v561, %v562
        %v564 = vrot.slane %v450, 1
        %v565 = vsel %vm520, %v562, %v564
        %v566 = vrot.slane %v451, 1
        %v567 = vrot.slane %v452, 1
        %v568 = vsel %vm520, %v566, %v567
        %v569 = vrot.slane %v453, 1
        %v570 = vsel %vm520, %v567, %v569
        %v571 = vrot.slane %v454, 1
        %v572 = vrot.slane %v455, 1
        %v573 = vsel %vm520, %v571, %v572
        %v574 = vrot.slane %v456, 1
        %v575 = vsel %vm520, %v572, %v574
        %v576 = vrot.slane %v457, 1
        %v577 = vrot.slane %v458, 1
        %v578 = vsel %vm520, %v576, %v577
        %v579 = vrot.slane %v459, 1
        %v580 = vsel %vm520, %v577, %v579
        %v581 = vrot.slane %v460, 1
        %v582 = vrot.slane %v461, 1
        %v583 = vsel %vm520, %v581, %v582
        %v584 = vrot.slane %v462, 1
        %v585 = vsel %vm520, %v582, %v584
        %v586 = vrot.slane %v463, 1
        %v587 = vrot.slane %v464, 1
        %v588 = vsel %vm520, %v586, %v587
        %v589 = vrot.slane %v465, 1
        %v590 = vsel %vm520, %v587, %v589
        %v591 = vrot.slane %v466, 1
        %v592 = vrot.slane %v467, 1
        %v593 = vsel %vm520, %v591, %v592
        %v594 = vrot.slane %v468, 1
        %v595 = vsel %vm520, %v592, %v594
        %v596 = vrot.slane %v469, 1
        %v597 = vrot.slane %v470, 1
        %v598 = vsel %vm520, %v596, %v597
        %v599 = vrot.slane %v471, 1
        %v600 = vsel %vm520, %v597, %v599
        %v633 = vadd.f32 %v354, %v523
        %v634 = vadd.f32 %v355, %v525
        %v635 = vadd.f32 %v356, %v528
        %v636 = vadd.f32 %v357, %v530
        %v637 = vadd.f32 %v358, %v533
        %v638 = vadd.f32 %v359, %v535
        %v639 = vadd.f32 %v360, %v538
        %v640 = vadd.f32 %v361, %v540
        %v641 = vadd.f32 %v362, %v543
        %v642 = vadd.f32 %v363, %v545
        %v643 = vadd.f32 %v364, %v548
        %v644 = vadd.f32 %v365, %v550
        %v645 = vadd.f32 %v366, %v553
        %v646 = vadd.f32 %v367, %v555
        %v647 = vadd.f32 %v368, %v558
        %v648 = vadd.f32 %v369, %v560
        %v649 = vadd.f32 %v370, %v563
        %v650 = vadd.f32 %v371, %v565
        %v651 = vadd.f32 %v372, %v568
        %v652 = vadd.f32 %v373, %v570
        %v653 = vadd.f32 %v374, %v573
        %v654 = vadd.f32 %v375, %v575
        %v655 = vadd.f32 %v376, %v578
        %v656 = vadd.f32 %v377, %v580
        %v657 = vadd.f32 %v378, %v583
        %v658 = vadd.f32 %v379, %v585
        %v659 = vadd.f32 %v380, %v588
        %v660 = vadd.f32 %v381, %v590
        %v661 = vadd.f32 %v382, %v593
        %v662 = vadd.f32 %v383, %v595
        %v663 = vadd.f32 %v384, %v598
        %v664 = vadd.f32 %v385, %v600
        %v665 = vld [vmem:[%s251] sm:$0xe]
        %v666 = vld [vmem:[%s251 + $0xc] sm:$0xe]
        %v667 = vld [vmem:[%s251 + $0x18] sm:$0xe]
        %v668 = vld [vmem:[%s251 + $0x24] sm:$0xe]
        %v669 = vld [vmem:[%s251 + $0x30] sm:$0xe]
        %v670 = vld [vmem:[%s251 + $0x3c] sm:$0xe]
        %v671 = vld [vmem:[%s251 + $0x48] sm:$0xe]
        %v672 = vld [vmem:[%s251 + $0x54] sm:$0xe]
        %v673 = vld [vmem:[%s251 + $0x60] sm:$0xe]
        %v674 = vld [vmem:[%s251 + $0x6c] sm:$0xe]
        %v675 = vld [vmem:[%s251 + $0x78] sm:$0xe]
        %v676 = vld [vmem:[%s251 + $0x84] sm:$0xe]
        %v677 = vld [vmem:[%s251 + $0x90] sm:$0xe]
        %v678 = vld [vmem:[%s251 + $0x9c] sm:$0xe]
        %v679 = vld [vmem:[%s251 + $0xa8] sm:$0xe]
        %v680 = vld [vmem:[%s251 + $0xb4] sm:$0xe]
        %v681 = vunpack.c.l.bf16 %v665
        %v682 = vunpack.c.l.bf16 %v666
        %v683 = vunpack.c.l.bf16 %v667
        %v684 = vunpack.c.l.bf16 %v668
        %v685 = vunpack.c.l.bf16 %v669
        %v686 = vunpack.c.l.bf16 %v670
        %v687 = vunpack.c.l.bf16 %v671
        %v688 = vunpack.c.l.bf16 %v672
        %v689 = vunpack.c.l.bf16 %v673
        %v690 = vunpack.c.l.bf16 %v674
        %v691 = vunpack.c.l.bf16 %v675
        %v692 = vunpack.c.l.bf16 %v676
        %v693 = vunpack.c.l.bf16 %v677
        %v694 = vunpack.c.l.bf16 %v678
        %v695 = vunpack.c.l.bf16 %v679
        %v696 = vunpack.c.l.bf16 %v680
        %v698 = vlaneseq
        %v699 = vshrl.u32 %v698, 7
        %v700 = vsub.s32 0, %v699
        %v701 = vrot.slane %v242, %v700
        %v703 = vmul.f32 %v681, %v701
        %v704 = vmul.f32 %v285, %v701
        %v705 = vmul.f32 %v402, %v701
        %v706 = vmul.f32 %v682, %v701
        %v707 = vmul.f32 %v287, %v701
        %v708 = vmul.f32 %v403, %v701
        %v709 = vmul.f32 %v683, %v701
        %v710 = vmul.f32 %v289, %v701
        %v711 = vmul.f32 %v404, %v701
        %v712 = vmul.f32 %v684, %v701
        %v713 = vmul.f32 %v291, %v701
        %v714 = vmul.f32 %v405, %v701
        %v715 = vmul.f32 %v685, %v701
        %v716 = vmul.f32 %v293, %v701
        %v717 = vmul.f32 %v406, %v701
        %v718 = vmul.f32 %v686, %v701
        %v719 = vmul.f32 %v295, %v701
        %v720 = vmul.f32 %v407, %v701
        %v721 = vmul.f32 %v687, %v701
        %v722 = vmul.f32 %v297, %v701
        %v723 = vmul.f32 %v408, %v701
        %v724 = vmul.f32 %v688, %v701
        %v725 = vmul.f32 %v299, %v701
        %v726 = vmul.f32 %v409, %v701
        %v727 = vmul.f32 %v689, %v701
        %v728 = vmul.f32 %v301, %v701
        %v729 = vmul.f32 %v410, %v701
        %v730 = vmul.f32 %v690, %v701
        %v731 = vmul.f32 %v303, %v701
        %v732 = vmul.f32 %v411, %v701
        %v733 = vmul.f32 %v691, %v701
        %v734 = vmul.f32 %v305, %v701
        %v735 = vmul.f32 %v412, %v701
        %v736 = vmul.f32 %v692, %v701
        %v737 = vmul.f32 %v307, %v701
        %v738 = vmul.f32 %v413, %v701
        %v739 = vmul.f32 %v693, %v701
        %v740 = vmul.f32 %v309, %v701
        %v741 = vmul.f32 %v414, %v701
        %v742 = vmul.f32 %v694, %v701
        %v743 = vmul.f32 %v311, %v701
        %v744 = vmul.f32 %v415, %v701
        %v745 = vmul.f32 %v695, %v701
        %v746 = vmul.f32 %v313, %v701
        %v747 = vmul.f32 %v416, %v701
        %v748 = vmul.f32 %v696, %v701
        %v749 = vmul.f32 %v315, %v701
        %v750 = vmul.f32 %v417, %v701
        %vm799 = vcmask 1045504
        %v800 = vrot.slane %v703, 2
        %v801 = vrot.slane %v704, 2
        %v802 = vsel %vm799, %v800, %v801
        %v803 = vrot.slane %v705, 2
        %v804 = vsel %vm799, %v801, %v803
        %v805 = vrot.slane %v706, 2
        %v806 = vrot.slane %v707, 2
        %v807 = vsel %vm799, %v805, %v806
        %v808 = vrot.slane %v708, 2
        %v809 = vsel %vm799, %v806, %v808
        %v810 = vrot.slane %v709, 2
        %v811 = vrot.slane %v710, 2
        %v812 = vsel %vm799, %v810, %v811
        %v813 = vrot.slane %v711, 2
        %v814 = vsel %vm799, %v811, %v813
        %v815 = vrot.slane %v712, 2
        %v816 = vrot.slane %v713, 2
        %v817 = vsel %vm799, %v815, %v816
        %v818 = vrot.slane %v714, 2
        %v819 = vsel %vm799, %v816, %v818
        %v820 = vrot.slane %v715, 2
        %v821 = vrot.slane %v716, 2
        %v822 = vsel %vm799, %v820, %v821
        %v823 = vrot.slane %v717, 2
        %v824 = vsel %vm799, %v821, %v823
        %v825 = vrot.slane %v718, 2
        %v826 = vrot.slane %v719, 2
        %v827 = vsel %vm799, %v825, %v826
        %v828 = vrot.slane %v720, 2
        %v829 = vsel %vm799, %v826, %v828
        %v830 = vrot.slane %v721, 2
        %v831 = vrot.slane %v722, 2
        %v832 = vsel %vm799, %v830, %v831
        %v833 = vrot.slane %v723, 2
        %v834 = vsel %vm799, %v831, %v833
        %v835 = vrot.slane %v724, 2
        %v836 = vrot.slane %v725, 2
        %v837 = vsel %vm799, %v835, %v836
        %v838 = vrot.slane %v726, 2
        %v839 = vsel %vm799, %v836, %v838
        %v840 = vrot.slane %v727, 2
        %v841 = vrot.slane %v728, 2
        %v842 = vsel %vm799, %v840, %v841
        %v843 = vrot.slane %v729, 2
        %v844 = vsel %vm799, %v841, %v843
        %v845 = vrot.slane %v730, 2
        %v846 = vrot.slane %v731, 2
        %v847 = vsel %vm799, %v845, %v846
        %v848 = vrot.slane %v732, 2
        %v849 = vsel %vm799, %v846, %v848
        %v850 = vrot.slane %v733, 2
        %v851 = vrot.slane %v734, 2
        %v852 = vsel %vm799, %v850, %v851
        %v853 = vrot.slane %v735, 2
        %v854 = vsel %vm799, %v851, %v853
        %v855 = vrot.slane %v736, 2
        %v856 = vrot.slane %v737, 2
        %v857 = vsel %vm799, %v855, %v856
        %v858 = vrot.slane %v738, 2
        %v859 = vsel %vm799, %v856, %v858
        %v860 = vrot.slane %v739, 2
        %v861 = vrot.slane %v740, 2
        %v862 = vsel %vm799, %v860, %v861
        %v863 = vrot.slane %v741, 2
        %v864 = vsel %vm799, %v861, %v863
        %v865 = vrot.slane %v742, 2
        %v866 = vrot.slane %v743, 2
        %v867 = vsel %vm799, %v865, %v866
        %v868 = vrot.slane %v744, 2
        %v869 = vsel %vm799, %v866, %v868
        %v870 = vrot.slane %v745, 2
        %v871 = vrot.slane %v746, 2
        %v872 = vsel %vm799, %v870, %v871
        %v873 = vrot.slane %v747, 2
        %v874 = vsel %vm799, %v871, %v873
        %v875 = vrot.slane %v748, 2
        %v876 = vrot.slane %v749, 2
        %v877 = vsel %vm799, %v875, %v876
        %v878 = vrot.slane %v750, 2
        %v879 = vsel %vm799, %v876, %v878
        %v912 = vadd.f32 %v633, %v802
        %v913 = vadd.f32 %v634, %v804
        %v914 = vadd.f32 %v635, %v807
        %v915 = vadd.f32 %v636, %v809
        %v916 = vadd.f32 %v637, %v812
        %v917 = vadd.f32 %v638, %v814
        %v918 = vadd.f32 %v639, %v817
        %v919 = vadd.f32 %v640, %v819
        %v920 = vadd.f32 %v641, %v822
        %v921 = vadd.f32 %v642, %v824
        %v922 = vadd.f32 %v643, %v827
        %v923 = vadd.f32 %v644, %v829
        %v924 = vadd.f32 %v645, %v832
        %v925 = vadd.f32 %v646, %v834
        %v926 = vadd.f32 %v647, %v837
        %v927 = vadd.f32 %v648, %v839
        %v928 = vadd.f32 %v649, %v842
        %v929 = vadd.f32 %v650, %v844
        %v930 = vadd.f32 %v651, %v847
        %v931 = vadd.f32 %v652, %v849
        %v932 = vadd.f32 %v653, %v852
        %v933 = vadd.f32 %v654, %v854
        %v934 = vadd.f32 %v655, %v857
        %v935 = vadd.f32 %v656, %v859
        %v936 = vadd.f32 %v657, %v862
        %v937 = vadd.f32 %v658, %v864
        %v938 = vadd.f32 %v659, %v867
        %v939 = vadd.f32 %v660, %v869
        %v940 = vadd.f32 %v661, %v872
        %v941 = vadd.f32 %v662, %v874
        %v942 = vadd.f32 %v663, %v877
        %v943 = vadd.f32 %v664, %v879
        %s944 = sadd.s32 %s239, 1
        %s945 = smul.u32 %s944, 3
        %s946 = smul.addr %s945, 4
        %s947 = scalar_lea.vmem %s236, %s946
        %v948 = vld [vmem:[%s947] sm:$0xf]
        %v949 = vld [vmem:[%s947 + $0x4] sm:$0xf]
        %v950 = vld [vmem:[%s947 + $0xc] sm:$0xf]
        %v951 = vld [vmem:[%s947 + $0x10] sm:$0xf]
        %v952 = vld [vmem:[%s947 + $0x18] sm:$0xf]
        %v953 = vld [vmem:[%s947 + $0x1c] sm:$0xf]
        %v954 = vld [vmem:[%s947 + $0x24] sm:$0xf]
        %v955 = vld [vmem:[%s947 + $0x28] sm:$0xf]
        %v956 = vld [vmem:[%s947 + $0x30] sm:$0xf]
        %v957 = vld [vmem:[%s947 + $0x34] sm:$0xf]
        %v958 = vld [vmem:[%s947 + $0x3c] sm:$0xf]
        %v959 = vld [vmem:[%s947 + $0x40] sm:$0xf]
        %v960 = vld [vmem:[%s947 + $0x48] sm:$0xf]
        %v961 = vld [vmem:[%s947 + $0x4c] sm:$0xf]
        %v962 = vld [vmem:[%s947 + $0x54] sm:$0xf]
        %v963 = vld [vmem:[%s947 + $0x58] sm:$0xf]
        %v964 = vld [vmem:[%s947 + $0x60] sm:$0xf]
        %v965 = vld [vmem:[%s947 + $0x64] sm:$0xf]
        %v966 = vld [vmem:[%s947 + $0x6c] sm:$0xf]
        %v967 = vld [vmem:[%s947 + $0x70] sm:$0xf]
        %v968 = vld [vmem:[%s947 + $0x78] sm:$0xf]
        %v969 = vld [vmem:[%s947 + $0x7c] sm:$0xf]
        %v970 = vld [vmem:[%s947 + $0x84] sm:$0xf]
        %v971 = vld [vmem:[%s947 + $0x88] sm:$0xf]
        %v972 = vld [vmem:[%s947 + $0x90] sm:$0xf]
        %v973 = vld [vmem:[%s947 + $0x94] sm:$0xf]
        %v974 = vld [vmem:[%s947 + $0x9c] sm:$0xf]
        %v975 = vld [vmem:[%s947 + $0xa0] sm:$0xf]
        %v976 = vld [vmem:[%s947 + $0xa8] sm:$0xf]
        %v977 = vld [vmem:[%s947 + $0xac] sm:$0xf]
        %v978 = vld [vmem:[%s947 + $0xb4] sm:$0xf]
        %v979 = vld [vmem:[%s947 + $0xb8] sm:$0xf]
        %v980 = vunpack.c.l.bf16 %v948
        %v981 = vunpack.c.l.bf16 %v949
        %v982 = vunpack.c.l.bf16 %v950
        %v983 = vunpack.c.l.bf16 %v951
        %v984 = vunpack.c.l.bf16 %v952
        %v985 = vunpack.c.l.bf16 %v953
        %v986 = vunpack.c.l.bf16 %v954
        %v987 = vunpack.c.l.bf16 %v955
        %v988 = vunpack.c.l.bf16 %v956
        %v989 = vunpack.c.l.bf16 %v957
        %v990 = vunpack.c.l.bf16 %v958
        %v991 = vunpack.c.l.bf16 %v959
        %v992 = vunpack.c.l.bf16 %v960
        %v993 = vunpack.c.l.bf16 %v961
        %v994 = vunpack.c.l.bf16 %v962
        %v995 = vunpack.c.l.bf16 %v963
        %v996 = vunpack.c.l.bf16 %v964
        %v997 = vunpack.c.l.bf16 %v965
        %v998 = vunpack.c.l.bf16 %v966
        %v999 = vunpack.c.l.bf16 %v967
        %v1000 = vunpack.c.l.bf16 %v968
        %v1001 = vunpack.c.l.bf16 %v969
        %v1002 = vunpack.c.l.bf16 %v970
        %v1003 = vunpack.c.l.bf16 %v971
        %v1004 = vunpack.c.l.bf16 %v972
        %v1005 = vunpack.c.l.bf16 %v973
        %v1006 = vunpack.c.l.bf16 %v974
        %v1007 = vunpack.c.l.bf16 %v975
        %v1008 = vunpack.c.l.bf16 %v976
        %v1009 = vunpack.c.l.bf16 %v977
        %v1010 = vunpack.c.l.bf16 %v978
        %v1011 = vunpack.c.l.bf16 %v979
        %v1013 = vlaneseq
        %v1014 = vshrl.u32 %v1013, 7
        %v1015 = vsub.s32 0, %v1014
        %v1016 = vrot.slane %v243, %v1015
        %v1018 = vmul.f32 %v980, %v1016
        %v1019 = vmul.f32 %v981, %v1016
        %v1020 = vmul.f32 %v982, %v1016
        %v1021 = vmul.f32 %v983, %v1016
        %v1022 = vmul.f32 %v984, %v1016
        %v1023 = vmul.f32 %v985, %v1016
        %v1024 = vmul.f32 %v986, %v1016
        %v1025 = vmul.f32 %v987, %v1016
        %v1026 = vmul.f32 %v988, %v1016
        %v1027 = vmul.f32 %v989, %v1016
        %v1028 = vmul.f32 %v990, %v1016
        %v1029 = vmul.f32 %v991, %v1016
        %v1030 = vmul.f32 %v992, %v1016
        %v1031 = vmul.f32 %v993, %v1016
        %v1032 = vmul.f32 %v994, %v1016
        %v1033 = vmul.f32 %v995, %v1016
        %v1034 = vmul.f32 %v996, %v1016
        %v1035 = vmul.f32 %v997, %v1016
        %v1036 = vmul.f32 %v998, %v1016
        %v1037 = vmul.f32 %v999, %v1016
        %v1038 = vmul.f32 %v1000, %v1016
        %v1039 = vmul.f32 %v1001, %v1016
        %v1040 = vmul.f32 %v1002, %v1016
        %v1041 = vmul.f32 %v1003, %v1016
        %v1042 = vmul.f32 %v1004, %v1016
        %v1043 = vmul.f32 %v1005, %v1016
        %v1044 = vmul.f32 %v1006, %v1016
        %v1045 = vmul.f32 %v1007, %v1016
        %v1046 = vmul.f32 %v1008, %v1016
        %v1047 = vmul.f32 %v1009, %v1016
        %v1048 = vmul.f32 %v1010, %v1016
        %v1049 = vmul.f32 %v1011, %v1016
        %v1050 = vadd.f32 %v912, %v1018
        %v1051 = vadd.f32 %v913, %v1019
        %v1052 = vadd.f32 %v914, %v1020
        %v1053 = vadd.f32 %v915, %v1021
        %v1054 = vadd.f32 %v916, %v1022
        %v1055 = vadd.f32 %v917, %v1023
        %v1056 = vadd.f32 %v918, %v1024
        %v1057 = vadd.f32 %v919, %v1025
        %v1058 = vadd.f32 %v920, %v1026
        %v1059 = vadd.f32 %v921, %v1027
        %v1060 = vadd.f32 %v922, %v1028
        %v1061 = vadd.f32 %v923, %v1029
        %v1062 = vadd.f32 %v924, %v1030
        %v1063 = vadd.f32 %v925, %v1031
        %v1064 = vadd.f32 %v926, %v1032
        %v1065 = vadd.f32 %v927, %v1033
        %v1066 = vadd.f32 %v928, %v1034
        %v1067 = vadd.f32 %v929, %v1035
        %v1068 = vadd.f32 %v930, %v1036
        %v1069 = vadd.f32 %v931, %v1037
        %v1070 = vadd.f32 %v932, %v1038
        %v1071 = vadd.f32 %v933, %v1039
        %v1072 = vadd.f32 %v934, %v1040
        %v1073 = vadd.f32 %v935, %v1041
        %v1074 = vadd.f32 %v936, %v1042
        %v1075 = vadd.f32 %v937, %v1043
        %v1076 = vadd.f32 %v938, %v1044
        %v1077 = vadd.f32 %v939, %v1045
        %v1078 = vadd.f32 %v940, %v1046
        %v1079 = vadd.f32 %v941, %v1047
        %v1080 = vadd.f32 %v942, %v1048
        %v1081 = vadd.f32 %v943, %v1049
        %v1082 = vld [vmem:[%s947 + $0x8] sm:$0x1]
        %v1083 = vld [vmem:[%s947 + $0x14] sm:$0x1]
        %v1084 = vld [vmem:[%s947 + $0x20] sm:$0x1]
        %v1085 = vld [vmem:[%s947 + $0x2c] sm:$0x1]
        %v1086 = vld [vmem:[%s947 + $0x38] sm:$0x1]
        %v1087 = vld [vmem:[%s947 + $0x44] sm:$0x1]
        %v1088 = vld [vmem:[%s947 + $0x50] sm:$0x1]
        %v1089 = vld [vmem:[%s947 + $0x5c] sm:$0x1]
        %v1090 = vld [vmem:[%s947 + $0x68] sm:$0x1]
        %v1091 = vld [vmem:[%s947 + $0x74] sm:$0x1]
        %v1092 = vld [vmem:[%s947 + $0x80] sm:$0x1]
        %v1093 = vld [vmem:[%s947 + $0x8c] sm:$0x1]
        %v1094 = vld [vmem:[%s947 + $0x98] sm:$0x1]
        %v1095 = vld [vmem:[%s947 + $0xa4] sm:$0x1]
        %v1096 = vld [vmem:[%s947 + $0xb0] sm:$0x1]
        %v1097 = vld [vmem:[%s947 + $0xbc] sm:$0x1]
        %v1098 = vunpack.c.l.bf16 %v1082
        %v1099 = vunpack.c.l.bf16 %v1083
        %v1100 = vunpack.c.l.bf16 %v1084
        %v1101 = vunpack.c.l.bf16 %v1085
        %v1102 = vunpack.c.l.bf16 %v1086
        %v1103 = vunpack.c.l.bf16 %v1087
        %v1104 = vunpack.c.l.bf16 %v1088
        %v1105 = vunpack.c.l.bf16 %v1089
        %v1106 = vunpack.c.l.bf16 %v1090
        %v1107 = vunpack.c.l.bf16 %v1091
        %v1108 = vunpack.c.l.bf16 %v1092
        %v1109 = vunpack.c.l.bf16 %v1093
        %v1110 = vunpack.c.l.bf16 %v1094
        %v1111 = vunpack.c.l.bf16 %v1095
        %v1112 = vunpack.c.l.bf16 %v1096
        %v1113 = vunpack.c.l.bf16 %v1097
        %v1115 = vlaneseq
        %v1116 = vshrl.u32 %v1115, 7
        %v1117 = vsub.s32 0, %v1116
        %v1118 = vrot.slane %v244, %v1117
        %v1120 = vmul.f32 %v980, %v1118
        %v1121 = vmul.f32 %v981, %v1118
        %v1122 = vmul.f32 %v1098, %v1118
        %v1123 = vmul.f32 %v982, %v1118
        %v1124 = vmul.f32 %v983, %v1118
        %v1125 = vmul.f32 %v1099, %v1118
        %v1126 = vmul.f32 %v984, %v1118
        %v1127 = vmul.f32 %v985, %v1118
        %v1128 = vmul.f32 %v1100, %v1118
        %v1129 = vmul.f32 %v986, %v1118
        %v1130 = vmul.f32 %v987, %v1118
        %v1131 = vmul.f32 %v1101, %v1118
        %v1132 = vmul.f32 %v988, %v1118
        %v1133 = vmul.f32 %v989, %v1118
        %v1134 = vmul.f32 %v1102, %v1118
        %v1135 = vmul.f32 %v990, %v1118
        %v1136 = vmul.f32 %v991, %v1118
        %v1137 = vmul.f32 %v1103, %v1118
        %v1138 = vmul.f32 %v992, %v1118
        %v1139 = vmul.f32 %v993, %v1118
        %v1140 = vmul.f32 %v1104, %v1118
        %v1141 = vmul.f32 %v994, %v1118
        %v1142 = vmul.f32 %v995, %v1118
        %v1143 = vmul.f32 %v1105, %v1118
        %v1144 = vmul.f32 %v996, %v1118
        %v1145 = vmul.f32 %v997, %v1118
        %v1146 = vmul.f32 %v1106, %v1118
        %v1147 = vmul.f32 %v998, %v1118
        %v1148 = vmul.f32 %v999, %v1118
        %v1149 = vmul.f32 %v1107, %v1118
        %v1150 = vmul.f32 %v1000, %v1118
        %v1151 = vmul.f32 %v1001, %v1118
        %v1152 = vmul.f32 %v1108, %v1118
        %v1153 = vmul.f32 %v1002, %v1118
        %v1154 = vmul.f32 %v1003, %v1118
        %v1155 = vmul.f32 %v1109, %v1118
        %v1156 = vmul.f32 %v1004, %v1118
        %v1157 = vmul.f32 %v1005, %v1118
        %v1158 = vmul.f32 %v1110, %v1118
        %v1159 = vmul.f32 %v1006, %v1118
        %v1160 = vmul.f32 %v1007, %v1118
        %v1161 = vmul.f32 %v1111, %v1118
        %v1162 = vmul.f32 %v1008, %v1118
        %v1163 = vmul.f32 %v1009, %v1118
        %v1164 = vmul.f32 %v1112, %v1118
        %v1165 = vmul.f32 %v1010, %v1118
        %v1166 = vmul.f32 %v1011, %v1118
        %v1167 = vmul.f32 %v1113, %v1118
        %v1216 = vrot.slane %v1120, 1
        %v1217 = vrot.slane %v1121, 1
        %v1218 = vsel %vm520, %v1216, %v1217
        %v1219 = vrot.slane %v1122, 1
        %v1220 = vsel %vm520, %v1217, %v1219
        %v1221 = vrot.slane %v1123, 1
        %v1222 = vrot.slane %v1124, 1
        %v1223 = vsel %vm520, %v1221, %v1222
        %v1224 = vrot.slane %v1125, 1
        %v1225 = vsel %vm520, %v1222, %v1224
        %v1226 = vrot.slane %v1126, 1
        %v1227 = vrot.slane %v1127, 1
        %v1228 = vsel %vm520, %v1226, %v1227
        %v1229 = vrot.slane %v1128, 1
        %v1230 = vsel %vm520, %v1227, %v1229
        %v1231 = vrot.slane %v1129, 1
        %v1232 = vrot.slane %v1130, 1
        %v1233 = vsel %vm520, %v1231, %v1232
        %v1234 = vrot.slane %v1131, 1
        %v1235 = vsel %vm520, %v1232, %v1234
        %v1236 = vrot.slane %v1132, 1
        %v1237 = vrot.slane %v1133, 1
        %v1238 = vsel %vm520, %v1236, %v1237
        %v1239 = vrot.slane %v1134, 1
        %v1240 = vsel %vm520, %v1237, %v1239
        %v1241 = vrot.slane %v1135, 1
        %v1242 = vrot.slane %v1136, 1
        %v1243 = vsel %vm520, %v1241, %v1242
        %v1244 = vrot.slane %v1137, 1
        %v1245 = vsel %vm520, %v1242, %v1244
        %v1246 = vrot.slane %v1138, 1
        %v1247 = vrot.slane %v1139, 1
        %v1248 = vsel %vm520, %v1246, %v1247
        %v1249 = vrot.slane %v1140, 1
        %v1250 = vsel %vm520, %v1247, %v1249
        %v1251 = vrot.slane %v1141, 1
        %v1252 = vrot.slane %v1142, 1
        %v1253 = vsel %vm520, %v1251, %v1252
        %v1254 = vrot.slane %v1143, 1
        %v1255 = vsel %vm520, %v1252, %v1254
        %v1256 = vrot.slane %v1144, 1
        %v1257 = vrot.slane %v1145, 1
        %v1258 = vsel %vm520, %v1256, %v1257
        %v1259 = vrot.slane %v1146, 1
        %v1260 = vsel %vm520, %v1257, %v1259
        %v1261 = vrot.slane %v1147, 1
        %v1262 = vrot.slane %v1148, 1
        %v1263 = vsel %vm520, %v1261, %v1262
        %v1264 = vrot.slane %v1149, 1
        %v1265 = vsel %vm520, %v1262, %v1264
        %v1266 = vrot.slane %v1150, 1
        %v1267 = vrot.slane %v1151, 1
        %v1268 = vsel %vm520, %v1266, %v1267
        %v1269 = vrot.slane %v1152, 1
        %v1270 = vsel %vm520, %v1267, %v1269
        %v1271 = vrot.slane %v1153, 1
        %v1272 = vrot.slane %v1154, 1
        %v1273 = vsel %vm520, %v1271, %v1272
        %v1274 = vrot.slane %v1155, 1
        %v1275 = vsel %vm520, %v1272, %v1274
        %v1276 = vrot.slane %v1156, 1
        %v1277 = vrot.slane %v1157, 1
        %v1278 = vsel %vm520, %v1276, %v1277
        %v1279 = vrot.slane %v1158, 1
        %v1280 = vsel %vm520, %v1277, %v1279
        %v1281 = vrot.slane %v1159, 1
        %v1282 = vrot.slane %v1160, 1
        %v1283 = vsel %vm520, %v1281, %v1282
        %v1284 = vrot.slane %v1161, 1
        %v1285 = vsel %vm520, %v1282, %v1284
        %v1286 = vrot.slane %v1162, 1
        %v1287 = vrot.slane %v1163, 1
        %v1288 = vsel %vm520, %v1286, %v1287
        %v1289 = vrot.slane %v1164, 1
        %v1290 = vsel %vm520, %v1287, %v1289
        %v1291 = vrot.slane %v1165, 1
        %v1292 = vrot.slane %v1166, 1
        %v1293 = vsel %vm520, %v1291, %v1292
        %v1294 = vrot.slane %v1167, 1
        %v1295 = vsel %vm520, %v1292, %v1294
        %v1328 = vadd.f32 %v1050, %v1218
        %v1329 = vadd.f32 %v1051, %v1220
        %v1330 = vadd.f32 %v1052, %v1223
        %v1331 = vadd.f32 %v1053, %v1225
        %v1332 = vadd.f32 %v1054, %v1228
        %v1333 = vadd.f32 %v1055, %v1230
        %v1334 = vadd.f32 %v1056, %v1233
        %v1335 = vadd.f32 %v1057, %v1235
        %v1336 = vadd.f32 %v1058, %v1238
        %v1337 = vadd.f32 %v1059, %v1240
        %v1338 = vadd.f32 %v1060, %v1243
        %v1339 = vadd.f32 %v1061, %v1245
        %v1340 = vadd.f32 %v1062, %v1248
        %v1341 = vadd.f32 %v1063, %v1250
        %v1342 = vadd.f32 %v1064, %v1253
        %v1343 = vadd.f32 %v1065, %v1255
        %v1344 = vadd.f32 %v1066, %v1258
        %v1345 = vadd.f32 %v1067, %v1260
        %v1346 = vadd.f32 %v1068, %v1263
        %v1347 = vadd.f32 %v1069, %v1265
        %v1348 = vadd.f32 %v1070, %v1268
        %v1349 = vadd.f32 %v1071, %v1270
        %v1350 = vadd.f32 %v1072, %v1273
        %v1351 = vadd.f32 %v1073, %v1275
        %v1352 = vadd.f32 %v1074, %v1278
        %v1353 = vadd.f32 %v1075, %v1280
        %v1354 = vadd.f32 %v1076, %v1283
        %v1355 = vadd.f32 %v1077, %v1285
        %v1356 = vadd.f32 %v1078, %v1288
        %v1357 = vadd.f32 %v1079, %v1290
        %v1358 = vadd.f32 %v1080, %v1293
        %v1359 = vadd.f32 %v1081, %v1295
        %v1360 = vld [vmem:[%s947] sm:$0xe]
        %v1361 = vld [vmem:[%s947 + $0xc] sm:$0xe]
        %v1362 = vld [vmem:[%s947 + $0x18] sm:$0xe]
        %v1363 = vld [vmem:[%s947 + $0x24] sm:$0xe]
        %v1364 = vld [vmem:[%s947 + $0x30] sm:$0xe]
        %v1365 = vld [vmem:[%s947 + $0x3c] sm:$0xe]
        %v1366 = vld [vmem:[%s947 + $0x48] sm:$0xe]
        %v1367 = vld [vmem:[%s947 + $0x54] sm:$0xe]
        %v1368 = vld [vmem:[%s947 + $0x60] sm:$0xe]
        %v1369 = vld [vmem:[%s947 + $0x6c] sm:$0xe]
        %v1370 = vld [vmem:[%s947 + $0x78] sm:$0xe]
        %v1371 = vld [vmem:[%s947 + $0x84] sm:$0xe]
        %v1372 = vld [vmem:[%s947 + $0x90] sm:$0xe]
        %v1373 = vld [vmem:[%s947 + $0x9c] sm:$0xe]
        %v1374 = vld [vmem:[%s947 + $0xa8] sm:$0xe]
        %v1375 = vld [vmem:[%s947 + $0xb4] sm:$0xe]
        %v1376 = vunpack.c.l.bf16 %v1360
        %v1377 = vunpack.c.l.bf16 %v1361
        %v1378 = vunpack.c.l.bf16 %v1362
        %v1379 = vunpack.c.l.bf16 %v1363
        %v1380 = vunpack.c.l.bf16 %v1364
        %v1381 = vunpack.c.l.bf16 %v1365
        %v1382 = vunpack.c.l.bf16 %v1366
        %v1383 = vunpack.c.l.bf16 %v1367
        %v1384 = vunpack.c.l.bf16 %v1368
        %v1385 = vunpack.c.l.bf16 %v1369
        %v1386 = vunpack.c.l.bf16 %v1370
        %v1387 = vunpack.c.l.bf16 %v1371
        %v1388 = vunpack.c.l.bf16 %v1372
        %v1389 = vunpack.c.l.bf16 %v1373
        %v1390 = vunpack.c.l.bf16 %v1374
        %v1391 = vunpack.c.l.bf16 %v1375
        %v1393 = vlaneseq
        %v1394 = vshrl.u32 %v1393, 7
        %v1395 = vsub.s32 0, %v1394
        %v1396 = vrot.slane %v245, %v1395
        %v1398 = vmul.f32 %v1376, %v1396
        %v1399 = vmul.f32 %v981, %v1396
        %v1400 = vmul.f32 %v1098, %v1396
        %v1401 = vmul.f32 %v1377, %v1396
        %v1402 = vmul.f32 %v983, %v1396
        %v1403 = vmul.f32 %v1099, %v1396
        %v1404 = vmul.f32 %v1378, %v1396
        %v1405 = vmul.f32 %v985, %v1396
        %v1406 = vmul.f32 %v1100, %v1396
        %v1407 = vmul.f32 %v1379, %v1396
        %v1408 = vmul.f32 %v987, %v1396
        %v1409 = vmul.f32 %v1101, %v1396
        %v1410 = vmul.f32 %v1380, %v1396
        %v1411 = vmul.f32 %v989, %v1396
        %v1412 = vmul.f32 %v1102, %v1396
        %v1413 = vmul.f32 %v1381, %v1396
        %v1414 = vmul.f32 %v991, %v1396
        %v1415 = vmul.f32 %v1103, %v1396
        %v1416 = vmul.f32 %v1382, %v1396
        %v1417 = vmul.f32 %v993, %v1396
        %v1418 = vmul.f32 %v1104, %v1396
        %v1419 = vmul.f32 %v1383, %v1396
        %v1420 = vmul.f32 %v995, %v1396
        %v1421 = vmul.f32 %v1105, %v1396
        %v1422 = vmul.f32 %v1384, %v1396
        %v1423 = vmul.f32 %v997, %v1396
        %v1424 = vmul.f32 %v1106, %v1396
        %v1425 = vmul.f32 %v1385, %v1396
        %v1426 = vmul.f32 %v999, %v1396
        %v1427 = vmul.f32 %v1107, %v1396
        %v1428 = vmul.f32 %v1386, %v1396
        %v1429 = vmul.f32 %v1001, %v1396
        %v1430 = vmul.f32 %v1108, %v1396
        %v1431 = vmul.f32 %v1387, %v1396
        %v1432 = vmul.f32 %v1003, %v1396
        %v1433 = vmul.f32 %v1109, %v1396
        %v1434 = vmul.f32 %v1388, %v1396
        %v1435 = vmul.f32 %v1005, %v1396
        %v1436 = vmul.f32 %v1110, %v1396
        %v1437 = vmul.f32 %v1389, %v1396
        %v1438 = vmul.f32 %v1007, %v1396
        %v1439 = vmul.f32 %v1111, %v1396
        %v1440 = vmul.f32 %v1390, %v1396
        %v1441 = vmul.f32 %v1009, %v1396
        %v1442 = vmul.f32 %v1112, %v1396
        %v1443 = vmul.f32 %v1391, %v1396
        %v1444 = vmul.f32 %v1011, %v1396
        %v1445 = vmul.f32 %v1113, %v1396
        %v1494 = vrot.slane %v1398, 2
        %v1495 = vrot.slane %v1399, 2
        %v1496 = vsel %vm799, %v1494, %v1495
        %v1497 = vrot.slane %v1400, 2
        %v1498 = vsel %vm799, %v1495, %v1497
        %v1499 = vrot.slane %v1401, 2
        %v1500 = vrot.slane %v1402, 2
        %v1501 = vsel %vm799, %v1499, %v1500
        %v1502 = vrot.slane %v1403, 2
        %v1503 = vsel %vm799, %v1500, %v1502
        %v1504 = vrot.slane %v1404, 2
        %v1505 = vrot.slane %v1405, 2
        %v1506 = vsel %vm799, %v1504, %v1505
        %v1507 = vrot.slane %v1406, 2
        %v1508 = vsel %vm799, %v1505, %v1507
        %v1509 = vrot.slane %v1407, 2
        %v1510 = vrot.slane %v1408, 2
        %v1511 = vsel %vm799, %v1509, %v1510
        %v1512 = vrot.slane %v1409, 2
        %v1513 = vsel %vm799, %v1510, %v1512
        %v1514 = vrot.slane %v1410, 2
        %v1515 = vrot.slane %v1411, 2
        %v1516 = vsel %vm799, %v1514, %v1515
        %v1517 = vrot.slane %v1412, 2
        %v1518 = vsel %vm799, %v1515, %v1517
        %v1519 = vrot.slane %v1413, 2
        %v1520 = vrot.slane %v1414, 2
        %v1521 = vsel %vm799, %v1519, %v1520
        %v1522 = vrot.slane %v1415, 2
        %v1523 = vsel %vm799, %v1520, %v1522
        %v1524 = vrot.slane %v1416, 2
        %v1525 = vrot.slane %v1417, 2
        %v1526 = vsel %vm799, %v1524, %v1525
        %v1527 = vrot.slane %v1418, 2
        %v1528 = vsel %vm799, %v1525, %v1527
        %v1529 = vrot.slane %v1419, 2
        %v1530 = vrot.slane %v1420, 2
        %v1531 = vsel %vm799, %v1529, %v1530
        %v1532 = vrot.slane %v1421, 2
        %v1533 = vsel %vm799, %v1530, %v1532
        %v1534 = vrot.slane %v1422, 2
        %v1535 = vrot.slane %v1423, 2
        %v1536 = vsel %vm799, %v1534, %v1535
        %v1537 = vrot.slane %v1424, 2
        %v1538 = vsel %vm799, %v1535, %v1537
        %v1539 = vrot.slane %v1425, 2
        %v1540 = vrot.slane %v1426, 2
        %v1541 = vsel %vm799, %v1539, %v1540
        %v1542 = vrot.slane %v1427, 2
        %v1543 = vsel %vm799, %v1540, %v1542
        %v1544 = vrot.slane %v1428, 2
        %v1545 = vrot.slane %v1429, 2
        %v1546 = vsel %vm799, %v1544, %v1545
        %v1547 = vrot.slane %v1430, 2
        %v1548 = vsel %vm799, %v1545, %v1547
        %v1549 = vrot.slane %v1431, 2
        %v1550 = vrot.slane %v1432, 2
        %v1551 = vsel %vm799, %v1549, %v1550
        %v1552 = vrot.slane %v1433, 2
        %v1553 = vsel %vm799, %v1550, %v1552
        %v1554 = vrot.slane %v1434, 2
        %v1555 = vrot.slane %v1435, 2
        %v1556 = vsel %vm799, %v1554, %v1555
        %v1557 = vrot.slane %v1436, 2
        %v1558 = vsel %vm799, %v1555, %v1557
        %v1559 = vrot.slane %v1437, 2
        %v1560 = vrot.slane %v1438, 2
        %v1561 = vsel %vm799, %v1559, %v1560
        %v1562 = vrot.slane %v1439, 2
        %v1563 = vsel %vm799, %v1560, %v1562
        %v1564 = vrot.slane %v1440, 2
        %v1565 = vrot.slane %v1441, 2
        %v1566 = vsel %vm799, %v1564, %v1565
        %v1567 = vrot.slane %v1442, 2
        %v1568 = vsel %vm799, %v1565, %v1567
        %v1569 = vrot.slane %v1443, 2
        %v1570 = vrot.slane %v1444, 2
        %v1571 = vsel %vm799, %v1569, %v1570
        %v1572 = vrot.slane %v1445, 2
        %v1573 = vsel %vm799, %v1570, %v1572
        %v1606 = vadd.f32 %v1328, %v1496
        %v1607 = vadd.f32 %v1329, %v1498
        %v1608 = vadd.f32 %v1330, %v1501
        %v1609 = vadd.f32 %v1331, %v1503
        %v1610 = vadd.f32 %v1332, %v1506
        %v1611 = vadd.f32 %v1333, %v1508
        %v1612 = vadd.f32 %v1334, %v1511
        %v1613 = vadd.f32 %v1335, %v1513
        %v1614 = vadd.f32 %v1336, %v1516
        %v1615 = vadd.f32 %v1337, %v1518
        %v1616 = vadd.f32 %v1338, %v1521
        %v1617 = vadd.f32 %v1339, %v1523
        %v1618 = vadd.f32 %v1340, %v1526
        %v1619 = vadd.f32 %v1341, %v1528
        %v1620 = vadd.f32 %v1342, %v1531
        %v1621 = vadd.f32 %v1343, %v1533
        %v1622 = vadd.f32 %v1344, %v1536
        %v1623 = vadd.f32 %v1345, %v1538
        %v1624 = vadd.f32 %v1346, %v1541
        %v1625 = vadd.f32 %v1347, %v1543
        %v1626 = vadd.f32 %v1348, %v1546
        %v1627 = vadd.f32 %v1349, %v1548
        %v1628 = vadd.f32 %v1350, %v1551
        %v1629 = vadd.f32 %v1351, %v1553
        %v1630 = vadd.f32 %v1352, %v1556
        %v1631 = vadd.f32 %v1353, %v1558
        %v1632 = vadd.f32 %v1354, %v1561
        %v1633 = vadd.f32 %v1355, %v1563
        %v1634 = vadd.f32 %v1356, %v1566
        %v1635 = vadd.f32 %v1357, %v1568
        %v1636 = vadd.f32 %v1358, %v1571
        %v1637 = vadd.f32 %v1359, %v1573
        %s1638 = sadd.s32 %s239, 2
        %s1639 = smul.u32 %s1638, 3
        %s1640 = smul.addr %s1639, 4
        %s1641 = scalar_lea.vmem %s236, %s1640
        %v1642 = vld [vmem:[%s1641] sm:$0xf]
        %v1643 = vld [vmem:[%s1641 + $0x4] sm:$0xf]
        %v1644 = vld [vmem:[%s1641 + $0xc] sm:$0xf]
        %v1645 = vld [vmem:[%s1641 + $0x10] sm:$0xf]
        %v1646 = vld [vmem:[%s1641 + $0x18] sm:$0xf]
        %v1647 = vld [vmem:[%s1641 + $0x1c] sm:$0xf]
        %v1648 = vld [vmem:[%s1641 + $0x24] sm:$0xf]
        %v1649 = vld [vmem:[%s1641 + $0x28] sm:$0xf]
        %v1650 = vld [vmem:[%s1641 + $0x30] sm:$0xf]
        %v1651 = vld [vmem:[%s1641 + $0x34] sm:$0xf]
        %v1652 = vld [vmem:[%s1641 + $0x3c] sm:$0xf]
        %v1653 = vld [vmem:[%s1641 + $0x40] sm:$0xf]
        %v1654 = vld [vmem:[%s1641 + $0x48] sm:$0xf]
        %v1655 = vld [vmem:[%s1641 + $0x4c] sm:$0xf]
        %v1656 = vld [vmem:[%s1641 + $0x54] sm:$0xf]
        %v1657 = vld [vmem:[%s1641 + $0x58] sm:$0xf]
        %v1658 = vld [vmem:[%s1641 + $0x60] sm:$0xf]
        %v1659 = vld [vmem:[%s1641 + $0x64] sm:$0xf]
        %v1660 = vld [vmem:[%s1641 + $0x6c] sm:$0xf]
        %v1661 = vld [vmem:[%s1641 + $0x70] sm:$0xf]
        %v1662 = vld [vmem:[%s1641 + $0x78] sm:$0xf]
        %v1663 = vld [vmem:[%s1641 + $0x7c] sm:$0xf]
        %v1664 = vld [vmem:[%s1641 + $0x84] sm:$0xf]
        %v1665 = vld [vmem:[%s1641 + $0x88] sm:$0xf]
        %v1666 = vld [vmem:[%s1641 + $0x90] sm:$0xf]
        %v1667 = vld [vmem:[%s1641 + $0x94] sm:$0xf]
        %v1668 = vld [vmem:[%s1641 + $0x9c] sm:$0xf]
        %v1669 = vld [vmem:[%s1641 + $0xa0] sm:$0xf]
        %v1670 = vld [vmem:[%s1641 + $0xa8] sm:$0xf]
        %v1671 = vld [vmem:[%s1641 + $0xac] sm:$0xf]
        %v1672 = vld [vmem:[%s1641 + $0xb4] sm:$0xf]
        %v1673 = vld [vmem:[%s1641 + $0xb8] sm:$0xf]
        %v1674 = vunpack.c.l.bf16 %v1642
        %v1675 = vunpack.c.l.bf16 %v1643
        %v1676 = vunpack.c.l.bf16 %v1644
        %v1677 = vunpack.c.l.bf16 %v1645
        %v1678 = vunpack.c.l.bf16 %v1646
        %v1679 = vunpack.c.l.bf16 %v1647
        %v1680 = vunpack.c.l.bf16 %v1648
        %v1681 = vunpack.c.l.bf16 %v1649
        %v1682 = vunpack.c.l.bf16 %v1650
        %v1683 = vunpack.c.l.bf16 %v1651
        %v1684 = vunpack.c.l.bf16 %v1652
        %v1685 = vunpack.c.l.bf16 %v1653
        %v1686 = vunpack.c.l.bf16 %v1654
        %v1687 = vunpack.c.l.bf16 %v1655
        %v1688 = vunpack.c.l.bf16 %v1656
        %v1689 = vunpack.c.l.bf16 %v1657
        %v1690 = vunpack.c.l.bf16 %v1658
        %v1691 = vunpack.c.l.bf16 %v1659
        %v1692 = vunpack.c.l.bf16 %v1660
        %v1693 = vunpack.c.l.bf16 %v1661
        %v1694 = vunpack.c.l.bf16 %v1662
        %v1695 = vunpack.c.l.bf16 %v1663
        %v1696 = vunpack.c.l.bf16 %v1664
        %v1697 = vunpack.c.l.bf16 %v1665
        %v1698 = vunpack.c.l.bf16 %v1666
        %v1699 = vunpack.c.l.bf16 %v1667
        %v1700 = vunpack.c.l.bf16 %v1668
        %v1701 = vunpack.c.l.bf16 %v1669
        %v1702 = vunpack.c.l.bf16 %v1670
        %v1703 = vunpack.c.l.bf16 %v1671
        %v1704 = vunpack.c.l.bf16 %v1672
        %v1705 = vunpack.c.l.bf16 %v1673
        %v1707 = vlaneseq
        %v1708 = vshrl.u32 %v1707, 7
        %v1709 = vsub.s32 0, %v1708
        %v1710 = vrot.slane %v246, %v1709
        %v1712 = vmul.f32 %v1674, %v1710
        %v1713 = vmul.f32 %v1675, %v1710
        %v1714 = vmul.f32 %v1676, %v1710
        %v1715 = vmul.f32 %v1677, %v1710
        %v1716 = vmul.f32 %v1678, %v1710
        %v1717 = vmul.f32 %v1679, %v1710
        %v1718 = vmul.f32 %v1680, %v1710
        %v1719 = vmul.f32 %v1681, %v1710
        %v1720 = vmul.f32 %v1682, %v1710
        %v1721 = vmul.f32 %v1683, %v1710
        %v1722 = vmul.f32 %v1684, %v1710
        %v1723 = vmul.f32 %v1685, %v1710
        %v1724 = vmul.f32 %v1686, %v1710
        %v1725 = vmul.f32 %v1687, %v1710
        %v1726 = vmul.f32 %v1688, %v1710
        %v1727 = vmul.f32 %v1689, %v1710
        %v1728 = vmul.f32 %v1690, %v1710
        %v1729 = vmul.f32 %v1691, %v1710
        %v1730 = vmul.f32 %v1692, %v1710
        %v1731 = vmul.f32 %v1693, %v1710
        %v1732 = vmul.f32 %v1694, %v1710
        %v1733 = vmul.f32 %v1695, %v1710
        %v1734 = vmul.f32 %v1696, %v1710
        %v1735 = vmul.f32 %v1697, %v1710
        %v1736 = vmul.f32 %v1698, %v1710
        %v1737 = vmul.f32 %v1699, %v1710
        %v1738 = vmul.f32 %v1700, %v1710
        %v1739 = vmul.f32 %v1701, %v1710
        %v1740 = vmul.f32 %v1702, %v1710
        %v1741 = vmul.f32 %v1703, %v1710
        %v1742 = vmul.f32 %v1704, %v1710
        %v1743 = vmul.f32 %v1705, %v1710
        %v1744 = vadd.f32 %v1606, %v1712
        %v1745 = vadd.f32 %v1607, %v1713
        %v1746 = vadd.f32 %v1608, %v1714
        %v1747 = vadd.f32 %v1609, %v1715
        %v1748 = vadd.f32 %v1610, %v1716
        %v1749 = vadd.f32 %v1611, %v1717
        %v1750 = vadd.f32 %v1612, %v1718
        %v1751 = vadd.f32 %v1613, %v1719
        %v1752 = vadd.f32 %v1614, %v1720
        %v1753 = vadd.f32 %v1615, %v1721
        %v1754 = vadd.f32 %v1616, %v1722
        %v1755 = vadd.f32 %v1617, %v1723
        %v1756 = vadd.f32 %v1618, %v1724
        %v1757 = vadd.f32 %v1619, %v1725
        %v1758 = vadd.f32 %v1620, %v1726
        %v1759 = vadd.f32 %v1621, %v1727
        %v1760 = vadd.f32 %v1622, %v1728
        %v1761 = vadd.f32 %v1623, %v1729
        %v1762 = vadd.f32 %v1624, %v1730
        %v1763 = vadd.f32 %v1625, %v1731
        %v1764 = vadd.f32 %v1626, %v1732
        %v1765 = vadd.f32 %v1627, %v1733
        %v1766 = vadd.f32 %v1628, %v1734
        %v1767 = vadd.f32 %v1629, %v1735
        %v1768 = vadd.f32 %v1630, %v1736
        %v1769 = vadd.f32 %v1631, %v1737
        %v1770 = vadd.f32 %v1632, %v1738
        %v1771 = vadd.f32 %v1633, %v1739
        %v1772 = vadd.f32 %v1634, %v1740
        %v1773 = vadd.f32 %v1635, %v1741
        %v1774 = vadd.f32 %v1636, %v1742
        %v1775 = vadd.f32 %v1637, %v1743
        %v1776 = vld [vmem:[%s1641 + $0x8] sm:$0x1]
        %v1777 = vld [vmem:[%s1641 + $0x14] sm:$0x1]
        %v1778 = vld [vmem:[%s1641 + $0x20] sm:$0x1]
        %v1779 = vld [vmem:[%s1641 + $0x2c] sm:$0x1]
        %v1780 = vld [vmem:[%s1641 + $0x38] sm:$0x1]
        %v1781 = vld [vmem:[%s1641 + $0x44] sm:$0x1]
        %v1782 = vld [vmem:[%s1641 + $0x50] sm:$0x1]
        %v1783 = vld [vmem:[%s1641 + $0x5c] sm:$0x1]
        %v1784 = vld [vmem:[%s1641 + $0x68] sm:$0x1]
        %v1785 = vld [vmem:[%s1641 + $0x74] sm:$0x1]
        %v1786 = vld [vmem:[%s1641 + $0x80] sm:$0x1]
        %v1787 = vld [vmem:[%s1641 + $0x8c] sm:$0x1]
        %v1788 = vld [vmem:[%s1641 + $0x98] sm:$0x1]
        %v1789 = vld [vmem:[%s1641 + $0xa4] sm:$0x1]
        %v1790 = vld [vmem:[%s1641 + $0xb0] sm:$0x1]
        %v1791 = vld [vmem:[%s1641 + $0xbc] sm:$0x1]
        %v1792 = vunpack.c.l.bf16 %v1776
        %v1793 = vunpack.c.l.bf16 %v1777
        %v1794 = vunpack.c.l.bf16 %v1778
        %v1795 = vunpack.c.l.bf16 %v1779
        %v1796 = vunpack.c.l.bf16 %v1780
        %v1797 = vunpack.c.l.bf16 %v1781
        %v1798 = vunpack.c.l.bf16 %v1782
        %v1799 = vunpack.c.l.bf16 %v1783
        %v1800 = vunpack.c.l.bf16 %v1784
        %v1801 = vunpack.c.l.bf16 %v1785
        %v1802 = vunpack.c.l.bf16 %v1786
        %v1803 = vunpack.c.l.bf16 %v1787
        %v1804 = vunpack.c.l.bf16 %v1788
        %v1805 = vunpack.c.l.bf16 %v1789
        %v1806 = vunpack.c.l.bf16 %v1790
        %v1807 = vunpack.c.l.bf16 %v1791
        %v1809 = vlaneseq
        %v1810 = vshrl.u32 %v1809, 7
        %v1811 = vsub.s32 0, %v1810
        %v1812 = vrot.slane %v247, %v1811
        %v1814 = vmul.f32 %v1674, %v1812
        %v1815 = vmul.f32 %v1675, %v1812
        %v1816 = vmul.f32 %v1792, %v1812
        %v1817 = vmul.f32 %v1676, %v1812
        %v1818 = vmul.f32 %v1677, %v1812
        %v1819 = vmul.f32 %v1793, %v1812
        %v1820 = vmul.f32 %v1678, %v1812
        %v1821 = vmul.f32 %v1679, %v1812
        %v1822 = vmul.f32 %v1794, %v1812
        %v1823 = vmul.f32 %v1680, %v1812
        %v1824 = vmul.f32 %v1681, %v1812
        %v1825 = vmul.f32 %v1795, %v1812
        %v1826 = vmul.f32 %v1682, %v1812
        %v1827 = vmul.f32 %v1683, %v1812
        %v1828 = vmul.f32 %v1796, %v1812
        %v1829 = vmul.f32 %v1684, %v1812
        %v1830 = vmul.f32 %v1685, %v1812
        %v1831 = vmul.f32 %v1797, %v1812
        %v1832 = vmul.f32 %v1686, %v1812
        %v1833 = vmul.f32 %v1687, %v1812
        %v1834 = vmul.f32 %v1798, %v1812
        %v1835 = vmul.f32 %v1688, %v1812
        %v1836 = vmul.f32 %v1689, %v1812
        %v1837 = vmul.f32 %v1799, %v1812
        %v1838 = vmul.f32 %v1690, %v1812
        %v1839 = vmul.f32 %v1691, %v1812
        %v1840 = vmul.f32 %v1800, %v1812
        %v1841 = vmul.f32 %v1692, %v1812
        %v1842 = vmul.f32 %v1693, %v1812
        %v1843 = vmul.f32 %v1801, %v1812
        %v1844 = vmul.f32 %v1694, %v1812
        %v1845 = vmul.f32 %v1695, %v1812
        %v1846 = vmul.f32 %v1802, %v1812
        %v1847 = vmul.f32 %v1696, %v1812
        %v1848 = vmul.f32 %v1697, %v1812
        %v1849 = vmul.f32 %v1803, %v1812
        %v1850 = vmul.f32 %v1698, %v1812
        %v1851 = vmul.f32 %v1699, %v1812
        %v1852 = vmul.f32 %v1804, %v1812
        %v1853 = vmul.f32 %v1700, %v1812
        %v1854 = vmul.f32 %v1701, %v1812
        %v1855 = vmul.f32 %v1805, %v1812
        %v1856 = vmul.f32 %v1702, %v1812
        %v1857 = vmul.f32 %v1703, %v1812
        %v1858 = vmul.f32 %v1806, %v1812
        %v1859 = vmul.f32 %v1704, %v1812
        %v1860 = vmul.f32 %v1705, %v1812
        %v1861 = vmul.f32 %v1807, %v1812
        %v1910 = vrot.slane %v1814, 1
        %v1911 = vrot.slane %v1815, 1
        %v1912 = vsel %vm520, %v1910, %v1911
        %v1913 = vrot.slane %v1816, 1
        %v1914 = vsel %vm520, %v1911, %v1913
        %v1915 = vrot.slane %v1817, 1
        %v1916 = vrot.slane %v1818, 1
        %v1917 = vsel %vm520, %v1915, %v1916
        %v1918 = vrot.slane %v1819, 1
        %v1919 = vsel %vm520, %v1916, %v1918
        %v1920 = vrot.slane %v1820, 1
        %v1921 = vrot.slane %v1821, 1
        %v1922 = vsel %vm520, %v1920, %v1921
        %v1923 = vrot.slane %v1822, 1
        %v1924 = vsel %vm520, %v1921, %v1923
        %v1925 = vrot.slane %v1823, 1
        %v1926 = vrot.slane %v1824, 1
        %v1927 = vsel %vm520, %v1925, %v1926
        %v1928 = vrot.slane %v1825, 1
        %v1929 = vsel %vm520, %v1926, %v1928
        %v1930 = vrot.slane %v1826, 1
        %v1931 = vrot.slane %v1827, 1
        %v1932 = vsel %vm520, %v1930, %v1931
        %v1933 = vrot.slane %v1828, 1
        %v1934 = vsel %vm520, %v1931, %v1933
        %v1935 = vrot.slane %v1829, 1
        %v1936 = vrot.slane %v1830, 1
        %v1937 = vsel %vm520, %v1935, %v1936
        %v1938 = vrot.slane %v1831, 1
        %v1939 = vsel %vm520, %v1936, %v1938
        %v1940 = vrot.slane %v1832, 1
        %v1941 = vrot.slane %v1833, 1
        %v1942 = vsel %vm520, %v1940, %v1941
        %v1943 = vrot.slane %v1834, 1
        %v1944 = vsel %vm520, %v1941, %v1943
        %v1945 = vrot.slane %v1835, 1
        %v1946 = vrot.slane %v1836, 1
        %v1947 = vsel %vm520, %v1945, %v1946
        %v1948 = vrot.slane %v1837, 1
        %v1949 = vsel %vm520, %v1946, %v1948
        %v1950 = vrot.slane %v1838, 1
        %v1951 = vrot.slane %v1839, 1
        %v1952 = vsel %vm520, %v1950, %v1951
        %v1953 = vrot.slane %v1840, 1
        %v1954 = vsel %vm520, %v1951, %v1953
        %v1955 = vrot.slane %v1841, 1
        %v1956 = vrot.slane %v1842, 1
        %v1957 = vsel %vm520, %v1955, %v1956
        %v1958 = vrot.slane %v1843, 1
        %v1959 = vsel %vm520, %v1956, %v1958
        %v1960 = vrot.slane %v1844, 1
        %v1961 = vrot.slane %v1845, 1
        %v1962 = vsel %vm520, %v1960, %v1961
        %v1963 = vrot.slane %v1846, 1
        %v1964 = vsel %vm520, %v1961, %v1963
        %v1965 = vrot.slane %v1847, 1
        %v1966 = vrot.slane %v1848, 1
        %v1967 = vsel %vm520, %v1965, %v1966
        %v1968 = vrot.slane %v1849, 1
        %v1969 = vsel %vm520, %v1966, %v1968
        %v1970 = vrot.slane %v1850, 1
        %v1971 = vrot.slane %v1851, 1
        %v1972 = vsel %vm520, %v1970, %v1971
        %v1973 = vrot.slane %v1852, 1
        %v1974 = vsel %vm520, %v1971, %v1973
        %v1975 = vrot.slane %v1853, 1
        %v1976 = vrot.slane %v1854, 1
        %v1977 = vsel %vm520, %v1975, %v1976
        %v1978 = vrot.slane %v1855, 1
        %v1979 = vsel %vm520, %v1976, %v1978
        %v1980 = vrot.slane %v1856, 1
        %v1981 = vrot.slane %v1857, 1
        %v1982 = vsel %vm520, %v1980, %v1981
        %v1983 = vrot.slane %v1858, 1
        %v1984 = vsel %vm520, %v1981, %v1983
        %v1985 = vrot.slane %v1859, 1
        %v1986 = vrot.slane %v1860, 1
        %v1987 = vsel %vm520, %v1985, %v1986
        %v1988 = vrot.slane %v1861, 1
        %v1989 = vsel %vm520, %v1986, %v1988
        %v2022 = vadd.f32 %v1744, %v1912
        %v2023 = vadd.f32 %v1745, %v1914
        %v2024 = vadd.f32 %v1746, %v1917
        %v2025 = vadd.f32 %v1747, %v1919
        %v2026 = vadd.f32 %v1748, %v1922
        %v2027 = vadd.f32 %v1749, %v1924
        %v2028 = vadd.f32 %v1750, %v1927
        %v2029 = vadd.f32 %v1751, %v1929
        %v2030 = vadd.f32 %v1752, %v1932
        %v2031 = vadd.f32 %v1753, %v1934
        %v2032 = vadd.f32 %v1754, %v1937
        %v2033 = vadd.f32 %v1755, %v1939
        %v2034 = vadd.f32 %v1756, %v1942
        %v2035 = vadd.f32 %v1757, %v1944
        %v2036 = vadd.f32 %v1758, %v1947
        %v2037 = vadd.f32 %v1759, %v1949
        %v2038 = vadd.f32 %v1760, %v1952
        %v2039 = vadd.f32 %v1761, %v1954
        %v2040 = vadd.f32 %v1762, %v1957
        %v2041 = vadd.f32 %v1763, %v1959
        %v2042 = vadd.f32 %v1764, %v1962
        %v2043 = vadd.f32 %v1765, %v1964
        %v2044 = vadd.f32 %v1766, %v1967
        %v2045 = vadd.f32 %v1767, %v1969
        %v2046 = vadd.f32 %v1768, %v1972
        %v2047 = vadd.f32 %v1769, %v1974
        %v2048 = vadd.f32 %v1770, %v1977
        %v2049 = vadd.f32 %v1771, %v1979
        %v2050 = vadd.f32 %v1772, %v1982
        %v2051 = vadd.f32 %v1773, %v1984
        %v2052 = vadd.f32 %v1774, %v1987
        %v2053 = vadd.f32 %v1775, %v1989
        %v2054 = vld [vmem:[%s1641] sm:$0xe]
        %v2055 = vld [vmem:[%s1641 + $0xc] sm:$0xe]
        %v2056 = vld [vmem:[%s1641 + $0x18] sm:$0xe]
        %v2057 = vld [vmem:[%s1641 + $0x24] sm:$0xe]
        %v2058 = vld [vmem:[%s1641 + $0x30] sm:$0xe]
        %v2059 = vld [vmem:[%s1641 + $0x3c] sm:$0xe]
        %v2060 = vld [vmem:[%s1641 + $0x48] sm:$0xe]
        %v2061 = vld [vmem:[%s1641 + $0x54] sm:$0xe]
        %v2062 = vld [vmem:[%s1641 + $0x60] sm:$0xe]
        %v2063 = vld [vmem:[%s1641 + $0x6c] sm:$0xe]
        %v2064 = vld [vmem:[%s1641 + $0x78] sm:$0xe]
        %v2065 = vld [vmem:[%s1641 + $0x84] sm:$0xe]
        %v2066 = vld [vmem:[%s1641 + $0x90] sm:$0xe]
        %v2067 = vld [vmem:[%s1641 + $0x9c] sm:$0xe]
        %v2068 = vld [vmem:[%s1641 + $0xa8] sm:$0xe]
        %v2069 = vld [vmem:[%s1641 + $0xb4] sm:$0xe]
        %v2070 = vunpack.c.l.bf16 %v2054
        %v2071 = vunpack.c.l.bf16 %v2055
        %v2072 = vunpack.c.l.bf16 %v2056
        %v2073 = vunpack.c.l.bf16 %v2057
        %v2074 = vunpack.c.l.bf16 %v2058
        %v2075 = vunpack.c.l.bf16 %v2059
        %v2076 = vunpack.c.l.bf16 %v2060
        %v2077 = vunpack.c.l.bf16 %v2061
        %v2078 = vunpack.c.l.bf16 %v2062
        %v2079 = vunpack.c.l.bf16 %v2063
        %v2080 = vunpack.c.l.bf16 %v2064
        %v2081 = vunpack.c.l.bf16 %v2065
        %v2082 = vunpack.c.l.bf16 %v2066
        %v2083 = vunpack.c.l.bf16 %v2067
        %v2084 = vunpack.c.l.bf16 %v2068
        %v2085 = vunpack.c.l.bf16 %v2069
        %v2087 = vlaneseq
        %v2088 = vshrl.u32 %v2087, 7
        %v2089 = vsub.s32 0, %v2088
        %v2090 = vrot.slane %v248, %v2089
        %v2092 = vmul.f32 %v2070, %v2090
        %v2093 = vmul.f32 %v1675, %v2090
        %v2094 = vmul.f32 %v1792, %v2090
        %v2095 = vmul.f32 %v2071, %v2090
        %v2096 = vmul.f32 %v1677, %v2090
        %v2097 = vmul.f32 %v1793, %v2090
        %v2098 = vmul.f32 %v2072, %v2090
        %v2099 = vmul.f32 %v1679, %v2090
        %v2100 = vmul.f32 %v1794, %v2090
        %v2101 = vmul.f32 %v2073, %v2090
        %v2102 = vmul.f32 %v1681, %v2090
        %v2103 = vmul.f32 %v1795, %v2090
        %v2104 = vmul.f32 %v2074, %v2090
        %v2105 = vmul.f32 %v1683, %v2090
        %v2106 = vmul.f32 %v1796, %v2090
        %v2107 = vmul.f32 %v2075, %v2090
        %v2108 = vmul.f32 %v1685, %v2090
        %v2109 = vmul.f32 %v1797, %v2090
        %v2110 = vmul.f32 %v2076, %v2090
        %v2111 = vmul.f32 %v1687, %v2090
        %v2112 = vmul.f32 %v1798, %v2090
        %v2113 = vmul.f32 %v2077, %v2090
        %v2114 = vmul.f32 %v1689, %v2090
        %v2115 = vmul.f32 %v1799, %v2090
        %v2116 = vmul.f32 %v2078, %v2090
        %v2117 = vmul.f32 %v1691, %v2090
        %v2118 = vmul.f32 %v1800, %v2090
        %v2119 = vmul.f32 %v2079, %v2090
        %v2120 = vmul.f32 %v1693, %v2090
        %v2121 = vmul.f32 %v1801, %v2090
        %v2122 = vmul.f32 %v2080, %v2090
        %v2123 = vmul.f32 %v1695, %v2090
        %v2124 = vmul.f32 %v1802, %v2090
        %v2125 = vmul.f32 %v2081, %v2090
        %v2126 = vmul.f32 %v1697, %v2090
        %v2127 = vmul.f32 %v1803, %v2090
        %v2128 = vmul.f32 %v2082, %v2090
        %v2129 = vmul.f32 %v1699, %v2090
        %v2130 = vmul.f32 %v1804, %v2090
        %v2131 = vmul.f32 %v2083, %v2090
        %v2132 = vmul.f32 %v1701, %v2090
        %v2133 = vmul.f32 %v1805, %v2090
        %v2134 = vmul.f32 %v2084, %v2090
        %v2135 = vmul.f32 %v1703, %v2090
        %v2136 = vmul.f32 %v1806, %v2090
        %v2137 = vmul.f32 %v2085, %v2090
        %v2138 = vmul.f32 %v1705, %v2090
        %v2139 = vmul.f32 %v1807, %v2090
        %v2188 = vrot.slane %v2092, 2
        %v2189 = vrot.slane %v2093, 2
        %v2190 = vsel %vm799, %v2188, %v2189
        %v2191 = vrot.slane %v2094, 2
        %v2192 = vsel %vm799, %v2189, %v2191
        %v2193 = vrot.slane %v2095, 2
        %v2194 = vrot.slane %v2096, 2
        %v2195 = vsel %vm799, %v2193, %v2194
        %v2196 = vrot.slane %v2097, 2
        %v2197 = vsel %vm799, %v2194, %v2196
        %v2198 = vrot.slane %v2098, 2
        %v2199 = vrot.slane %v2099, 2
        %v2200 = vsel %vm799, %v2198, %v2199
        %v2201 = vrot.slane %v2100, 2
        %v2202 = vsel %vm799, %v2199, %v2201
        %v2203 = vrot.slane %v2101, 2
        %v2204 = vrot.slane %v2102, 2
        %v2205 = vsel %vm799, %v2203, %v2204
        %v2206 = vrot.slane %v2103, 2
        %v2207 = vsel %vm799, %v2204, %v2206
        %v2208 = vrot.slane %v2104, 2
        %v2209 = vrot.slane %v2105, 2
        %v2210 = vsel %vm799, %v2208, %v2209
        %v2211 = vrot.slane %v2106, 2
        %v2212 = vsel %vm799, %v2209, %v2211
        %v2213 = vrot.slane %v2107, 2
        %v2214 = vrot.slane %v2108, 2
        %v2215 = vsel %vm799, %v2213, %v2214
        %v2216 = vrot.slane %v2109, 2
        %v2217 = vsel %vm799, %v2214, %v2216
        %v2218 = vrot.slane %v2110, 2
        %v2219 = vrot.slane %v2111, 2
        %v2220 = vsel %vm799, %v2218, %v2219
        %v2221 = vrot.slane %v2112, 2
        %v2222 = vsel %vm799, %v2219, %v2221
        %v2223 = vrot.slane %v2113, 2
        %v2224 = vrot.slane %v2114, 2
        %v2225 = vsel %vm799, %v2223, %v2224
        %v2226 = vrot.slane %v2115, 2
        %v2227 = vsel %vm799, %v2224, %v2226
        %v2228 = vrot.slane %v2116, 2
        %v2229 = vrot.slane %v2117, 2
        %v2230 = vsel %vm799, %v2228, %v2229
        %v2231 = vrot.slane %v2118, 2
        %v2232 = vsel %vm799, %v2229, %v2231
        %v2233 = vrot.slane %v2119, 2
        %v2234 = vrot.slane %v2120, 2
        %v2235 = vsel %vm799, %v2233, %v2234
        %v2236 = vrot.slane %v2121, 2
        %v2237 = vsel %vm799, %v2234, %v2236
        %v2238 = vrot.slane %v2122, 2
        %v2239 = vrot.slane %v2123, 2
        %v2240 = vsel %vm799, %v2238, %v2239
        %v2241 = vrot.slane %v2124, 2
        %v2242 = vsel %vm799, %v2239, %v2241
        %v2243 = vrot.slane %v2125, 2
        %v2244 = vrot.slane %v2126, 2
        %v2245 = vsel %vm799, %v2243, %v2244
        %v2246 = vrot.slane %v2127, 2
        %v2247 = vsel %vm799, %v2244, %v2246
        %v2248 = vrot.slane %v2128, 2
        %v2249 = vrot.slane %v2129, 2
        %v2250 = vsel %vm799, %v2248, %v2249
        %v2251 = vrot.slane %v2130, 2
        %v2252 = vsel %vm799, %v2249, %v2251
        %v2253 = vrot.slane %v2131, 2
        %v2254 = vrot.slane %v2132, 2
        %v2255 = vsel %vm799, %v2253, %v2254
        %v2256 = vrot.slane %v2133, 2
        %v2257 = vsel %vm799, %v2254, %v2256
        %v2258 = vrot.slane %v2134, 2
        %v2259 = vrot.slane %v2135, 2
        %v2260 = vsel %vm799, %v2258, %v2259
        %v2261 = vrot.slane %v2136, 2
        %v2262 = vsel %vm799, %v2259, %v2261
        %v2263 = vrot.slane %v2137, 2
        %v2264 = vrot.slane %v2138, 2
        %v2265 = vsel %vm799, %v2263, %v2264
        %v2266 = vrot.slane %v2139, 2
        %v2267 = vsel %vm799, %v2264, %v2266
        %v2300 = vadd.f32 %v2022, %v2190
        %v2301 = vadd.f32 %v2023, %v2192
        %v2302 = vadd.f32 %v2024, %v2195
        %v2303 = vadd.f32 %v2025, %v2197
        %v2304 = vadd.f32 %v2026, %v2200
        %v2305 = vadd.f32 %v2027, %v2202
        %v2306 = vadd.f32 %v2028, %v2205
        %v2307 = vadd.f32 %v2029, %v2207
        %v2308 = vadd.f32 %v2030, %v2210
        %v2309 = vadd.f32 %v2031, %v2212
        %v2310 = vadd.f32 %v2032, %v2215
        %v2311 = vadd.f32 %v2033, %v2217
        %v2312 = vadd.f32 %v2034, %v2220
        %v2313 = vadd.f32 %v2035, %v2222
        %v2314 = vadd.f32 %v2036, %v2225
        %v2315 = vadd.f32 %v2037, %v2227
        %v2316 = vadd.f32 %v2038, %v2230
        %v2317 = vadd.f32 %v2039, %v2232
        %v2318 = vadd.f32 %v2040, %v2235
        %v2319 = vadd.f32 %v2041, %v2237
        %v2320 = vadd.f32 %v2042, %v2240
        %v2321 = vadd.f32 %v2043, %v2242
        %v2322 = vadd.f32 %v2044, %v2245
        %v2323 = vadd.f32 %v2045, %v2247
        %v2324 = vadd.f32 %v2046, %v2250
        %v2325 = vadd.f32 %v2047, %v2252
        %v2326 = vadd.f32 %v2048, %v2255
        %v2327 = vadd.f32 %v2049, %v2257
        %v2328 = vadd.f32 %v2050, %v2260
        %v2329 = vadd.f32 %v2051, %v2262
        %v2330 = vadd.f32 %v2052, %v2265
        %v2331 = vadd.f32 %v2053, %v2267
        %v2332 = vld [vmem:[%s2] sm:$0x1]
        %v2334 = vlaneseq
        %v2335 = vshrl.u32 %v2334, 7
        %v2336 = vsub.s32 0, %v2335
        %v2337 = vrot.slane %v2332, %v2336
        %v2339 = vadd.f32 %v2300, %v2337
        %v2340 = vadd.f32 %v2301, %v2337
        %v2341 = vadd.f32 %v2302, %v2337
        %v2342 = vadd.f32 %v2303, %v2337
        %v2343 = vadd.f32 %v2304, %v2337
        %v2344 = vadd.f32 %v2305, %v2337
        %v2345 = vadd.f32 %v2306, %v2337
        %v2346 = vadd.f32 %v2307, %v2337
        %v2347 = vadd.f32 %v2308, %v2337
        %v2348 = vadd.f32 %v2309, %v2337
        %v2349 = vadd.f32 %v2310, %v2337
        %v2350 = vadd.f32 %v2311, %v2337
        %v2351 = vadd.f32 %v2312, %v2337
        %v2352 = vadd.f32 %v2313, %v2337
        %v2353 = vadd.f32 %v2314, %v2337
        %v2354 = vadd.f32 %v2315, %v2337
        %v2355 = vadd.f32 %v2316, %v2337
        %v2356 = vadd.f32 %v2317, %v2337
        %v2357 = vadd.f32 %v2318, %v2337
        %v2358 = vadd.f32 %v2319, %v2337
        %v2359 = vadd.f32 %v2320, %v2337
        %v2360 = vadd.f32 %v2321, %v2337
        %v2361 = vadd.f32 %v2322, %v2337
        %v2362 = vadd.f32 %v2323, %v2337
        %v2363 = vadd.f32 %v2324, %v2337
        %v2364 = vadd.f32 %v2325, %v2337
        %v2365 = vadd.f32 %v2326, %v2337
        %v2366 = vadd.f32 %v2327, %v2337
        %v2367 = vadd.f32 %v2328, %v2337
        %v2368 = vadd.f32 %v2329, %v2337
        %v2369 = vadd.f32 %v2330, %v2337
        %v2370 = vadd.f32 %v2331, %v2337
        %v2371 = vsub.f32 0.0, %v2339
        %v2372 = vsub.f32 0.0, %v2340
        %v2373 = vsub.f32 0.0, %v2341
        %v2374 = vsub.f32 0.0, %v2342
        %v2375 = vsub.f32 0.0, %v2343
        %v2376 = vsub.f32 0.0, %v2344
        %v2377 = vsub.f32 0.0, %v2345
        %v2378 = vsub.f32 0.0, %v2346
        %v2379 = vsub.f32 0.0, %v2347
        %v2380 = vsub.f32 0.0, %v2348
        %v2381 = vsub.f32 0.0, %v2349
        %v2382 = vsub.f32 0.0, %v2350
        %v2383 = vsub.f32 0.0, %v2351
        %v2384 = vsub.f32 0.0, %v2352
        %v2385 = vsub.f32 0.0, %v2353
        %v2386 = vsub.f32 0.0, %v2354
        %v2387 = vsub.f32 0.0, %v2355
        %v2388 = vsub.f32 0.0, %v2356
        %v2389 = vsub.f32 0.0, %v2357
        %v2390 = vsub.f32 0.0, %v2358
        %v2391 = vsub.f32 0.0, %v2359
        %v2392 = vsub.f32 0.0, %v2360
        %v2393 = vsub.f32 0.0, %v2361
        %v2394 = vsub.f32 0.0, %v2362
        %v2395 = vsub.f32 0.0, %v2363
        %v2396 = vsub.f32 0.0, %v2364
        %v2397 = vsub.f32 0.0, %v2365
        %v2398 = vsub.f32 0.0, %v2366
        %v2399 = vsub.f32 0.0, %v2367
        %v2400 = vsub.f32 0.0, %v2368
        %v2401 = vsub.f32 0.0, %v2369
        %v2402 = vsub.f32 0.0, %v2370
        %v2403 = vmul.f32 %v2371, 1.442695
        %v2404 = vpow.pop %v2403
        %v2405 = vmul.f32 %v2372, 1.442695
        %v2406 = vpow.pop %v2405
        %v2407 = vmul.f32 %v2373, 1.442695
        %v2408 = vpow.pop %v2407
        %v2409 = vmul.f32 %v2374, 1.442695
        %v2410 = vpow.pop %v2409
        %v2411 = vmul.f32 %v2375, 1.442695
        %v2412 = vpow.pop %v2411
        %v2413 = vmul.f32 %v2376, 1.442695
        %v2414 = vpow.pop %v2413
        %v2415 = vmul.f32 %v2377, 1.442695
        %v2416 = vpow.pop %v2415
        %v2417 = vmul.f32 %v2378, 1.442695
        %v2418 = vpow.pop %v2417
        %v2419 = vmul.f32 %v2379, 1.442695
        %v2420 = vpow.pop %v2419
        %v2421 = vmul.f32 %v2380, 1.442695
        %v2422 = vpow.pop %v2421
        %v2423 = vmul.f32 %v2381, 1.442695
        %v2424 = vpow.pop %v2423
        %v2425 = vmul.f32 %v2382, 1.442695
        %v2426 = vpow.pop %v2425
        %v2427 = vmul.f32 %v2383, 1.442695
        %v2428 = vpow.pop %v2427
        %v2429 = vmul.f32 %v2384, 1.442695
        %v2430 = vpow.pop %v2429
        %v2431 = vmul.f32 %v2385, 1.442695
        %v2432 = vpow.pop %v2431
        %v2433 = vmul.f32 %v2386, 1.442695
        %v2434 = vpow.pop %v2433
        %v2435 = vmul.f32 %v2387, 1.442695
        %v2436 = vpow.pop %v2435
        %v2437 = vmul.f32 %v2388, 1.442695
        %v2438 = vpow.pop %v2437
        %v2439 = vmul.f32 %v2389, 1.442695
        %v2440 = vpow.pop %v2439
        %v2441 = vmul.f32 %v2390, 1.442695
        %v2442 = vpow.pop %v2441
        %v2443 = vmul.f32 %v2391, 1.442695
        %v2444 = vpow.pop %v2443
        %v2445 = vmul.f32 %v2392, 1.442695
        %v2446 = vpow.pop %v2445
        %v2447 = vmul.f32 %v2393, 1.442695
        %v2448 = vpow.pop %v2447
        %v2449 = vmul.f32 %v2394, 1.442695
        %v2450 = vpow.pop %v2449
        %v2451 = vmul.f32 %v2395, 1.442695
        %v2452 = vpow.pop %v2451
        %v2453 = vmul.f32 %v2396, 1.442695
        %v2454 = vpow.pop %v2453
        %v2455 = vmul.f32 %v2397, 1.442695
        %v2456 = vpow.pop %v2455
        %v2457 = vmul.f32 %v2398, 1.442695
        %v2458 = vpow.pop %v2457
        %v2459 = vmul.f32 %v2399, 1.442695
        %v2460 = vpow.pop %v2459
        %v2461 = vmul.f32 %v2400, 1.442695
        %v2462 = vpow.pop %v2461
        %v2463 = vmul.f32 %v2401, 1.442695
        %v2464 = vpow.pop %v2463
        %v2465 = vmul.f32 %v2402, 1.442695
        %v2466 = vpow.pop %v2465
        %v2467 = vadd.f32 %v2404, 1.0
        %v2468 = vadd.f32 %v2406, 1.0
        %v2469 = vadd.f32 %v2408, 1.0
        %v2470 = vadd.f32 %v2410, 1.0
        %v2471 = vadd.f32 %v2412, 1.0
        %v2472 = vadd.f32 %v2414, 1.0
        %v2473 = vadd.f32 %v2416, 1.0
        %v2474 = vadd.f32 %v2418, 1.0
        %v2475 = vadd.f32 %v2420, 1.0
        %v2476 = vadd.f32 %v2422, 1.0
        %v2477 = vadd.f32 %v2424, 1.0
        %v2478 = vadd.f32 %v2426, 1.0
        %v2479 = vadd.f32 %v2428, 1.0
        %v2480 = vadd.f32 %v2430, 1.0
        %v2481 = vadd.f32 %v2432, 1.0
        %v2482 = vadd.f32 %v2434, 1.0
        %v2483 = vadd.f32 %v2436, 1.0
        %v2484 = vadd.f32 %v2438, 1.0
        %v2485 = vadd.f32 %v2440, 1.0
        %v2486 = vadd.f32 %v2442, 1.0
        %v2487 = vadd.f32 %v2444, 1.0
        %v2488 = vadd.f32 %v2446, 1.0
        %v2489 = vadd.f32 %v2448, 1.0
        %v2490 = vadd.f32 %v2450, 1.0
        %v2491 = vadd.f32 %v2452, 1.0
        %v2492 = vadd.f32 %v2454, 1.0
        %v2493 = vadd.f32 %v2456, 1.0
        %v2494 = vadd.f32 %v2458, 1.0
        %v2495 = vadd.f32 %v2460, 1.0
        %v2496 = vadd.f32 %v2462, 1.0
        %v2497 = vadd.f32 %v2464, 1.0
        %v2498 = vadd.f32 %v2466, 1.0
        %v2499 = vrcp.pop %v2467
        %v2500 = vmul.f32 1.0, %v2499
        %v2501 = vrcp.pop %v2468
        %v2502 = vmul.f32 1.0, %v2501
        %v2503 = vrcp.pop %v2469
        %v2504 = vmul.f32 1.0, %v2503
        %v2505 = vrcp.pop %v2470
        %v2506 = vmul.f32 1.0, %v2505
        %v2507 = vrcp.pop %v2471
        %v2508 = vmul.f32 1.0, %v2507
        %v2509 = vrcp.pop %v2472
        %v2510 = vmul.f32 1.0, %v2509
        %v2511 = vrcp.pop %v2473
        %v2512 = vmul.f32 1.0, %v2511
        %v2513 = vrcp.pop %v2474
        %v2514 = vmul.f32 1.0, %v2513
        %v2515 = vrcp.pop %v2475
        %v2516 = vmul.f32 1.0, %v2515
        %v2517 = vrcp.pop %v2476
        %v2518 = vmul.f32 1.0, %v2517
        %v2519 = vrcp.pop %v2477
        %v2520 = vmul.f32 1.0, %v2519
        %v2521 = vrcp.pop %v2478
        %v2522 = vmul.f32 1.0, %v2521
        %v2523 = vrcp.pop %v2479
        %v2524 = vmul.f32 1.0, %v2523
        %v2525 = vrcp.pop %v2480
        %v2526 = vmul.f32 1.0, %v2525
        %v2527 = vrcp.pop %v2481
        %v2528 = vmul.f32 1.0, %v2527
        %v2529 = vrcp.pop %v2482
        %v2530 = vmul.f32 1.0, %v2529
        %v2531 = vrcp.pop %v2483
        %v2532 = vmul.f32 1.0, %v2531
        %v2533 = vrcp.pop %v2484
        %v2534 = vmul.f32 1.0, %v2533
        %v2535 = vrcp.pop %v2485
        %v2536 = vmul.f32 1.0, %v2535
        %v2537 = vrcp.pop %v2486
        %v2538 = vmul.f32 1.0, %v2537
        %v2539 = vrcp.pop %v2487
        %v2540 = vmul.f32 1.0, %v2539
        %v2541 = vrcp.pop %v2488
        %v2542 = vmul.f32 1.0, %v2541
        %v2543 = vrcp.pop %v2489
        %v2544 = vmul.f32 1.0, %v2543
        %v2545 = vrcp.pop %v2490
        %v2546 = vmul.f32 1.0, %v2545
        %v2547 = vrcp.pop %v2491
        %v2548 = vmul.f32 1.0, %v2547
        %v2549 = vrcp.pop %v2492
        %v2550 = vmul.f32 1.0, %v2549
        %v2551 = vrcp.pop %v2493
        %v2552 = vmul.f32 1.0, %v2551
        %v2553 = vrcp.pop %v2494
        %v2554 = vmul.f32 1.0, %v2553
        %v2555 = vrcp.pop %v2495
        %v2556 = vmul.f32 1.0, %v2555
        %v2557 = vrcp.pop %v2496
        %v2558 = vmul.f32 1.0, %v2557
        %v2559 = vrcp.pop %v2497
        %v2560 = vmul.f32 1.0, %v2559
        %v2561 = vrcp.pop %v2498
        %v2562 = vmul.f32 1.0, %v2561
        %v2563 = vmul.f32 %v2339, %v2500
        %v2564 = vmul.f32 %v2340, %v2502
        %v2565 = vmul.f32 %v2341, %v2504
        %v2566 = vmul.f32 %v2342, %v2506
        %v2567 = vmul.f32 %v2343, %v2508
        %v2568 = vmul.f32 %v2344, %v2510
        %v2569 = vmul.f32 %v2345, %v2512
        %v2570 = vmul.f32 %v2346, %v2514
        %v2571 = vmul.f32 %v2347, %v2516
        %v2572 = vmul.f32 %v2348, %v2518
        %v2573 = vmul.f32 %v2349, %v2520
        %v2574 = vmul.f32 %v2350, %v2522
        %v2575 = vmul.f32 %v2351, %v2524
        %v2576 = vmul.f32 %v2352, %v2526
        %v2577 = vmul.f32 %v2353, %v2528
        %v2578 = vmul.f32 %v2354, %v2530
        %v2579 = vmul.f32 %v2355, %v2532
        %v2580 = vmul.f32 %v2356, %v2534
        %v2581 = vmul.f32 %v2357, %v2536
        %v2582 = vmul.f32 %v2358, %v2538
        %v2583 = vmul.f32 %v2359, %v2540
        %v2584 = vmul.f32 %v2360, %v2542
        %v2585 = vmul.f32 %v2361, %v2544
        %v2586 = vmul.f32 %v2362, %v2546
        %v2587 = vmul.f32 %v2363, %v2548
        %v2588 = vmul.f32 %v2364, %v2550
        %v2589 = vmul.f32 %v2365, %v2552
        %v2590 = vmul.f32 %v2366, %v2554
        %v2591 = vmul.f32 %v2367, %v2556
        %v2592 = vmul.f32 %v2368, %v2558
        %v2593 = vmul.f32 %v2369, %v2560
        %v2594 = vmul.f32 %v2370, %v2562
        %v2595 = vpack.c.bf16 %v2564, %v2563
        %v2596 = vpack.c.bf16 %v2566, %v2565
        %v2597 = vpack.c.bf16 %v2568, %v2567
        %v2598 = vpack.c.bf16 %v2570, %v2569
        %v2599 = vpack.c.bf16 %v2572, %v2571
        %v2600 = vpack.c.bf16 %v2574, %v2573
        %v2601 = vpack.c.bf16 %v2576, %v2575
        %v2602 = vpack.c.bf16 %v2578, %v2577
        %v2603 = vpack.c.bf16 %v2580, %v2579
        %v2604 = vpack.c.bf16 %v2582, %v2581
        %v2605 = vpack.c.bf16 %v2584, %v2583
        %v2606 = vpack.c.bf16 %v2586, %v2585
        %v2607 = vpack.c.bf16 %v2588, %v2587
        %v2608 = vpack.c.bf16 %v2590, %v2589
        %v2609 = vpack.c.bf16 %v2592, %v2591
        %v2610 = vpack.c.bf16 %v2594, %v2593
        %v2611 = vld [vmem:[%s3] sm:$0xf]
        %v2612 = vld [vmem:[%s3 + $0x4] sm:$0xf]
        %v2613 = vld [vmem:[%s3 + $0x8] sm:$0xf]
        %v2614 = vld [vmem:[%s3 + $0xc] sm:$0xf]
        %v2615 = vld [vmem:[%s4] sm:$0x1]
        %v2617 = vlaneseq
        %v2618 = vshrl.u32 %v2617, 7
        %v2619 = vsub.s32 0, %v2618
        %v2620 = vrot.slane %v2615, %v2619
        %v2626 = vunpack.c.l.b16 %v2611
        %v2627 = vunpack.c.l.b16 %v2612
        %v2628 = vunpack.c.l.b16 %v2613
        %v2629 = vunpack.c.l.b16 %v2614
        %v2630 = vpack.c.b16 %v2627, %v2626
        %v2631 = vpack.c.b16 %v2629, %v2628
        %vm2634 = vcmask 261120
        %v2636 = vsel %vm2634, %v2595, 0
        %v2639 = vsel %vm2634, %v2596, 0
        %v2642 = vsel %vm2634, %v2597, 0
        %v2645 = vsel %vm2634, %v2598, 0
        %v2648 = vsel %vm2634, %v2599, 0
        %v2651 = vsel %vm2634, %v2600, 0
        %v2654 = vsel %vm2634, %v2601, 0
        %v2657 = vsel %vm2634, %v2602, 0
        %v2660 = vsel %vm2634, %v2603, 0
        %v2663 = vsel %vm2634, %v2604, 0
        %v2666 = vsel %vm2634, %v2605, 0
        %v2669 = vsel %vm2634, %v2606, 0
        %v2672 = vsel %vm2634, %v2607, 0
        %v2675 = vsel %vm2634, %v2608, 0
        %v2678 = vsel %vm2634, %v2609, 0
        %v2681 = vsel %vm2634, %v2610, 0
        %2683 = vmatprep.subr.bf16.mxu0 0
        %2684 = vmatpush1.bf16.msra.mxu0 0
        %2685 = vmatprep.subr.bf16.mxu0 0
        %2686 = vmatpush1.bf16.msra.mxu0 0
        %2687 = vmatprep.subr.bf16.mxu0 0
        %2688 = vmatpush1.bf16.msra.mxu0 0
        %2689 = vmatprep.subr.bf16.mxu0 0
        %2690 = vmatpush1.bf16.msra.mxu0 0
        %2691 = vmatprep.subr.bf16.mxu0 0
        %2692 = vmatpush1.bf16.msra.mxu0 0
        %2693 = vmatprep.subr.bf16.mxu0 0
        %2694 = vmatpush1.bf16.msra.mxu0 0
        %2695 = vmatprep.subr.bf16.mxu0 0
        %2696 = vmatpush1.bf16.msra.mxu0 %v2631
        %2697 = vmatprep.subr.bf16.mxu0 0
        %2698 = vmatpush1.bf16.msra.mxu0 %v2630
        %2699 = vmatprep.subr.bf16.mxu0 0
        %2700 = vmatpush2.bf16.msra.mxu0 0
        %2701 = vmatprep.subr.bf16.mxu0 0
        %2702 = vmatpush2.bf16.msra.mxu0 0
        %2703 = vmatprep.subr.bf16.mxu0 0
        %2704 = vmatpush2.bf16.msra.mxu0 0
        %2705 = vmatprep.subr.bf16.mxu0 0
        %2706 = vmatpush2.bf16.msra.mxu0 0
        %2707 = vmatprep.subr.bf16.mxu0 0
        %2708 = vmatpush2.bf16.msra.mxu0 0
        %2709 = vmatprep.subr.bf16.mxu0 0
        %2710 = vmatpush2.bf16.msra.mxu0 0
        %2711 = vmatprep.subr.bf16.mxu0 0
        %2712 = vmatpush2.bf16.msra.mxu0 0
        %2713 = vmatprep.subr.bf16.mxu0 0
        %2714 = vmatpush2.bf16.msra.mxu0 0
        %2715 = vmatprep.mubr.bf16.mxu0 0
        %2716 = vmatmul.mubr.bf16.gmra.mxu0 %v2636
        %v2717 = vpop.f32.mrf.mxu0
        %v2718 = vadd.f32 %v2620, %v2717
        %v2719 = vpop.f32.mrf.mxu0
        %v2720 = vpop.f32.mrf.mxu0
        %v2721 = vadd.f32 %v2620, %v2720
        %v2722 = vpop.f32.mrf.mxu0
        %2723 = vmatprep.mubr.bf16.mxu0 0
        %2724 = vmatmul.mubr.bf16.gmra.mxu0 %v2639
        %v2725 = vpop.f32.mrf.mxu0
        %v2726 = vadd.f32 %v2620, %v2725
        %v2727 = vpop.f32.mrf.mxu0
        %v2728 = vpop.f32.mrf.mxu0
        %v2729 = vadd.f32 %v2620, %v2728
        %v2730 = vpop.f32.mrf.mxu0
        %2731 = vmatprep.mubr.bf16.mxu0 0
        %2732 = vmatmul.mubr.bf16.gmra.mxu0 %v2642
        %v2733 = vpop.f32.mrf.mxu0
        %v2734 = vadd.f32 %v2620, %v2733
        %v2735 = vpop.f32.mrf.mxu0
        %v2736 = vpop.f32.mrf.mxu0
        %v2737 = vadd.f32 %v2620, %v2736
        %v2738 = vpop.f32.mrf.mxu0
        %2739 = vmatprep.mubr.bf16.mxu0 0
        %2740 = vmatmul.mubr.bf16.gmra.mxu0 %v2645
        %v2741 = vpop.f32.mrf.mxu0
        %v2742 = vadd.f32 %v2620, %v2741
        %v2743 = vpop.f32.mrf.mxu0
        %v2744 = vpop.f32.mrf.mxu0
        %v2745 = vadd.f32 %v2620, %v2744
        %v2746 = vpop.f32.mrf.mxu0
        %2747 = vmatprep.mubr.bf16.mxu0 0
        %2748 = vmatmul.mubr.bf16.gmra.mxu0 %v2648
        %v2749 = vpop.f32.mrf.mxu0
        %v2750 = vadd.f32 %v2620, %v2749
        %v2751 = vpop.f32.mrf.mxu0
        %v2752 = vpop.f32.mrf.mxu0
        %v2753 = vadd.f32 %v2620, %v2752
        %v2754 = vpop.f32.mrf.mxu0
        %2755 = vmatprep.mubr.bf16.mxu0 0
        %2756 = vmatmul.mubr.bf16.gmra.mxu0 %v2651
        %v2757 = vpop.f32.mrf.mxu0
        %v2758 = vadd.f32 %v2620, %v2757
        %v2759 = vpop.f32.mrf.mxu0
        %v2760 = vpop.f32.mrf.mxu0
        %v2761 = vadd.f32 %v2620, %v2760
        %v2762 = vpop.f32.mrf.mxu0
        %2763 = vmatprep.mubr.bf16.mxu0 0
        %2764 = vmatmul.mubr.bf16.gmra.mxu0 %v2654
        %v2765 = vpop.f32.mrf.mxu0
        %v2766 = vadd.f32 %v2620, %v2765
        %v2767 = vpop.f32.mrf.mxu0
        %v2768 = vpop.f32.mrf.mxu0
        %v2769 = vadd.f32 %v2620, %v2768
        %v2770 = vpop.f32.mrf.mxu0
        %2771 = vmatprep.mubr.bf16.mxu0 0
        %2772 = vmatmul.mubr.bf16.gmra.mxu0 %v2657
        %v2773 = vpop.f32.mrf.mxu0
        %v2774 = vadd.f32 %v2620, %v2773
        %v2775 = vpop.f32.mrf.mxu0
        %v2776 = vpop.f32.mrf.mxu0
        %v2777 = vadd.f32 %v2620, %v2776
        %v2778 = vpop.f32.mrf.mxu0
        %2779 = vmatprep.mubr.bf16.mxu0 0
        %2780 = vmatmul.mubr.bf16.gmra.mxu0 %v2660
        %v2781 = vpop.f32.mrf.mxu0
        %v2782 = vadd.f32 %v2620, %v2781
        %v2783 = vpop.f32.mrf.mxu0
        %v2784 = vpop.f32.mrf.mxu0
        %v2785 = vadd.f32 %v2620, %v2784
        %v2786 = vpop.f32.mrf.mxu0
        %2787 = vmatprep.mubr.bf16.mxu0 0
        %2788 = vmatmul.mubr.bf16.gmra.mxu0 %v2663
        %v2789 = vpop.f32.mrf.mxu0
        %v2790 = vadd.f32 %v2620, %v2789
        %v2791 = vpop.f32.mrf.mxu0
        %v2792 = vpop.f32.mrf.mxu0
        %v2793 = vadd.f32 %v2620, %v2792
        %v2794 = vpop.f32.mrf.mxu0
        %2795 = vmatprep.mubr.bf16.mxu0 0
        %2796 = vmatmul.mubr.bf16.gmra.mxu0 %v2666
        %v2797 = vpop.f32.mrf.mxu0
        %v2798 = vadd.f32 %v2620, %v2797
        %v2799 = vpop.f32.mrf.mxu0
        %v2800 = vpop.f32.mrf.mxu0
        %v2801 = vadd.f32 %v2620, %v2800
        %v2802 = vpop.f32.mrf.mxu0
        %2803 = vmatprep.mubr.bf16.mxu0 0
        %2804 = vmatmul.mubr.bf16.gmra.mxu0 %v2669
        %v2805 = vpop.f32.mrf.mxu0
        %v2806 = vadd.f32 %v2620, %v2805
        %v2807 = vpop.f32.mrf.mxu0
        %v2808 = vpop.f32.mrf.mxu0
        %v2809 = vadd.f32 %v2620, %v2808
        %v2810 = vpop.f32.mrf.mxu0
        %2811 = vmatprep.mubr.bf16.mxu0 0
        %2812 = vmatmul.mubr.bf16.gmra.mxu0 %v2672
        %v2813 = vpop.f32.mrf.mxu0
        %v2814 = vadd.f32 %v2620, %v2813
        %v2815 = vpop.f32.mrf.mxu0
        %v2816 = vpop.f32.mrf.mxu0
        %v2817 = vadd.f32 %v2620, %v2816
        %v2818 = vpop.f32.mrf.mxu0
        %2819 = vmatprep.mubr.bf16.mxu0 0
        %2820 = vmatmul.mubr.bf16.gmra.mxu0 %v2675
        %v2821 = vpop.f32.mrf.mxu0
        %v2822 = vadd.f32 %v2620, %v2821
        %v2823 = vpop.f32.mrf.mxu0
        %v2824 = vpop.f32.mrf.mxu0
        %v2825 = vadd.f32 %v2620, %v2824
        %v2826 = vpop.f32.mrf.mxu0
        %2827 = vmatprep.mubr.bf16.mxu0 0
        %2828 = vmatmul.mubr.bf16.gmra.mxu0 %v2678
        %v2829 = vpop.f32.mrf.mxu0
        %v2830 = vadd.f32 %v2620, %v2829
        %v2831 = vpop.f32.mrf.mxu0
        %v2832 = vpop.f32.mrf.mxu0
        %v2833 = vadd.f32 %v2620, %v2832
        %v2834 = vpop.f32.mrf.mxu0
        %2835 = vmatprep.mubr.bf16.mxu0 0
        %2836 = vmatmul.mubr.bf16.gmra.mxu0 %v2681
        %v2837 = vpop.f32.mrf.mxu0
        %v2838 = vadd.f32 %v2620, %v2837
        %v2839 = vpop.f32.mrf.mxu0
        %v2840 = vpop.f32.mrf.mxu0
        %v2841 = vadd.f32 %v2620, %v2840
        %v2842 = vpop.f32.mrf.mxu0
        %2843 = vdwg.mxu0
        %v2844 = vsub.f32 0.0, %v2718
        %v2845 = vsub.f32 0.0, %v2721
        %v2846 = vsub.f32 0.0, %v2726
        %v2847 = vsub.f32 0.0, %v2729
        %v2848 = vsub.f32 0.0, %v2734
        %v2849 = vsub.f32 0.0, %v2737
        %v2850 = vsub.f32 0.0, %v2742
        %v2851 = vsub.f32 0.0, %v2745
        %v2852 = vsub.f32 0.0, %v2750
        %v2853 = vsub.f32 0.0, %v2753
        %v2854 = vsub.f32 0.0, %v2758
        %v2855 = vsub.f32 0.0, %v2761
        %v2856 = vsub.f32 0.0, %v2766
        %v2857 = vsub.f32 0.0, %v2769
        %v2858 = vsub.f32 0.0, %v2774
        %v2859 = vsub.f32 0.0, %v2777
        %v2860 = vsub.f32 0.0, %v2782
        %v2861 = vsub.f32 0.0, %v2785
        %v2862 = vsub.f32 0.0, %v2790
        %v2863 = vsub.f32 0.0, %v2793
        %v2864 = vsub.f32 0.0, %v2798
        %v2865 = vsub.f32 0.0, %v2801
        %v2866 = vsub.f32 0.0, %v2806
        %v2867 = vsub.f32 0.0, %v2809
        %v2868 = vsub.f32 0.0, %v2814
        %v2869 = vsub.f32 0.0, %v2817
        %v2870 = vsub.f32 0.0, %v2822
        %v2871 = vsub.f32 0.0, %v2825
        %v2872 = vsub.f32 0.0, %v2830
        %v2873 = vsub.f32 0.0, %v2833
        %v2874 = vsub.f32 0.0, %v2838
        %v2875 = vsub.f32 0.0, %v2841
        %v2876 = vmul.f32 %v2844, 1.442695
        %v2877 = vpow.pop %v2876
        %v2878 = vmul.f32 %v2845, 1.442695
        %v2879 = vpow.pop %v2878
        %v2880 = vmul.f32 %v2846, 1.442695
        %v2881 = vpow.pop %v2880
        %v2882 = vmul.f32 %v2847, 1.442695
        %v2883 = vpow.pop %v2882
        %v2884 = vmul.f32 %v2848, 1.442695
        %v2885 = vpow.pop %v2884
        %v2886 = vmul.f32 %v2849, 1.442695
        %v2887 = vpow.pop %v2886
        %v2888 = vmul.f32 %v2850, 1.442695
        %v2889 = vpow.pop %v2888
        %v2890 = vmul.f32 %v2851, 1.442695
        %v2891 = vpow.pop %v2890
        %v2892 = vmul.f32 %v2852, 1.442695
        %v2893 = vpow.pop %v2892
        %v2894 = vmul.f32 %v2853, 1.442695
        %v2895 = vpow.pop %v2894
        %v2896 = vmul.f32 %v2854, 1.442695
        %v2897 = vpow.pop %v2896
        %v2898 = vmul.f32 %v2855, 1.442695
        %v2899 = vpow.pop %v2898
        %v2900 = vmul.f32 %v2856, 1.442695
        %v2901 = vpow.pop %v2900
        %v2902 = vmul.f32 %v2857, 1.442695
        %v2903 = vpow.pop %v2902
        %v2904 = vmul.f32 %v2858, 1.442695
        %v2905 = vpow.pop %v2904
        %v2906 = vmul.f32 %v2859, 1.442695
        %v2907 = vpow.pop %v2906
        %v2908 = vmul.f32 %v2860, 1.442695
        %v2909 = vpow.pop %v2908
        %v2910 = vmul.f32 %v2861, 1.442695
        %v2911 = vpow.pop %v2910
        %v2912 = vmul.f32 %v2862, 1.442695
        %v2913 = vpow.pop %v2912
        %v2914 = vmul.f32 %v2863, 1.442695
        %v2915 = vpow.pop %v2914
        %v2916 = vmul.f32 %v2864, 1.442695
        %v2917 = vpow.pop %v2916
        %v2918 = vmul.f32 %v2865, 1.442695
        %v2919 = vpow.pop %v2918
        %v2920 = vmul.f32 %v2866, 1.442695
        %v2921 = vpow.pop %v2920
        %v2922 = vmul.f32 %v2867, 1.442695
        %v2923 = vpow.pop %v2922
        %v2924 = vmul.f32 %v2868, 1.442695
        %v2925 = vpow.pop %v2924
        %v2926 = vmul.f32 %v2869, 1.442695
        %v2927 = vpow.pop %v2926
        %v2928 = vmul.f32 %v2870, 1.442695
        %v2929 = vpow.pop %v2928
        %v2930 = vmul.f32 %v2871, 1.442695
        %v2931 = vpow.pop %v2930
        %v2932 = vmul.f32 %v2872, 1.442695
        %v2933 = vpow.pop %v2932
        %v2934 = vmul.f32 %v2873, 1.442695
        %v2935 = vpow.pop %v2934
        %v2936 = vmul.f32 %v2874, 1.442695
        %v2937 = vpow.pop %v2936
        %v2938 = vmul.f32 %v2875, 1.442695
        %v2939 = vpow.pop %v2938
        %v2940 = vadd.f32 %v2877, 1.0
        %v2941 = vadd.f32 %v2879, 1.0
        %v2942 = vadd.f32 %v2881, 1.0
        %v2943 = vadd.f32 %v2883, 1.0
        %v2944 = vadd.f32 %v2885, 1.0
        %v2945 = vadd.f32 %v2887, 1.0
        %v2946 = vadd.f32 %v2889, 1.0
        %v2947 = vadd.f32 %v2891, 1.0
        %v2948 = vadd.f32 %v2893, 1.0
        %v2949 = vadd.f32 %v2895, 1.0
        %v2950 = vadd.f32 %v2897, 1.0
        %v2951 = vadd.f32 %v2899, 1.0
        %v2952 = vadd.f32 %v2901, 1.0
        %v2953 = vadd.f32 %v2903, 1.0
        %v2954 = vadd.f32 %v2905, 1.0
        %v2955 = vadd.f32 %v2907, 1.0
        %v2956 = vadd.f32 %v2909, 1.0
        %v2957 = vadd.f32 %v2911, 1.0
        %v2958 = vadd.f32 %v2913, 1.0
        %v2959 = vadd.f32 %v2915, 1.0
        %v2960 = vadd.f32 %v2917, 1.0
        %v2961 = vadd.f32 %v2919, 1.0
        %v2962 = vadd.f32 %v2921, 1.0
        %v2963 = vadd.f32 %v2923, 1.0
        %v2964 = vadd.f32 %v2925, 1.0
        %v2965 = vadd.f32 %v2927, 1.0
        %v2966 = vadd.f32 %v2929, 1.0
        %v2967 = vadd.f32 %v2931, 1.0
        %v2968 = vadd.f32 %v2933, 1.0
        %v2969 = vadd.f32 %v2935, 1.0
        %v2970 = vadd.f32 %v2937, 1.0
        %v2971 = vadd.f32 %v2939, 1.0
        %v2972 = vrcp.pop %v2940
        %v2973 = vmul.f32 1.0, %v2972
        %v2974 = vrcp.pop %v2941
        %v2975 = vmul.f32 1.0, %v2974
        %v2976 = vrcp.pop %v2942
        %v2977 = vmul.f32 1.0, %v2976
        %v2978 = vrcp.pop %v2943
        %v2979 = vmul.f32 1.0, %v2978
        %v2980 = vrcp.pop %v2944
        %v2981 = vmul.f32 1.0, %v2980
        %v2982 = vrcp.pop %v2945
        %v2983 = vmul.f32 1.0, %v2982
        %v2984 = vrcp.pop %v2946
        %v2985 = vmul.f32 1.0, %v2984
        %v2986 = vrcp.pop %v2947
        %v2987 = vmul.f32 1.0, %v2986
        %v2988 = vrcp.pop %v2948
        %v2989 = vmul.f32 1.0, %v2988
        %v2990 = vrcp.pop %v2949
        %v2991 = vmul.f32 1.0, %v2990
        %v2992 = vrcp.pop %v2950
        %v2993 = vmul.f32 1.0, %v2992
        %v2994 = vrcp.pop %v2951
        %v2995 = vmul.f32 1.0, %v2994
        %v2996 = vrcp.pop %v2952
        %v2997 = vmul.f32 1.0, %v2996
        %v2998 = vrcp.pop %v2953
        %v2999 = vmul.f32 1.0, %v2998
        %v3000 = vrcp.pop %v2954
        %v3001 = vmul.f32 1.0, %v3000
        %v3002 = vrcp.pop %v2955
        %v3003 = vmul.f32 1.0, %v3002
        %v3004 = vrcp.pop %v2956
        %v3005 = vmul.f32 1.0, %v3004
        %v3006 = vrcp.pop %v2957
        %v3007 = vmul.f32 1.0, %v3006
        %v3008 = vrcp.pop %v2958
        %v3009 = vmul.f32 1.0, %v3008
        %v3010 = vrcp.pop %v2959
        %v3011 = vmul.f32 1.0, %v3010
        %v3012 = vrcp.pop %v2960
        %v3013 = vmul.f32 1.0, %v3012
        %v3014 = vrcp.pop %v2961
        %v3015 = vmul.f32 1.0, %v3014
        %v3016 = vrcp.pop %v2962
        %v3017 = vmul.f32 1.0, %v3016
        %v3018 = vrcp.pop %v2963
        %v3019 = vmul.f32 1.0, %v3018
        %v3020 = vrcp.pop %v2964
        %v3021 = vmul.f32 1.0, %v3020
        %v3022 = vrcp.pop %v2965
        %v3023 = vmul.f32 1.0, %v3022
        %v3024 = vrcp.pop %v2966
        %v3025 = vmul.f32 1.0, %v3024
        %v3026 = vrcp.pop %v2967
        %v3027 = vmul.f32 1.0, %v3026
        %v3028 = vrcp.pop %v2968
        %v3029 = vmul.f32 1.0, %v3028
        %v3030 = vrcp.pop %v2969
        %v3031 = vmul.f32 1.0, %v3030
        %v3032 = vrcp.pop %v2970
        %v3033 = vmul.f32 1.0, %v3032
        %v3034 = vrcp.pop %v2971
        %v3035 = vmul.f32 1.0, %v3034
        %v3036 = vmul.f32 %v2718, %v2973
        %v3037 = vmul.f32 %v2721, %v2975
        %v3038 = vmul.f32 %v2726, %v2977
        %v3039 = vmul.f32 %v2729, %v2979
        %v3040 = vmul.f32 %v2734, %v2981
        %v3041 = vmul.f32 %v2737, %v2983
        %v3042 = vmul.f32 %v2742, %v2985
        %v3043 = vmul.f32 %v2745, %v2987
        %v3044 = vmul.f32 %v2750, %v2989
        %v3045 = vmul.f32 %v2753, %v2991
        %v3046 = vmul.f32 %v2758, %v2993
        %v3047 = vmul.f32 %v2761, %v2995
        %v3048 = vmul.f32 %v2766, %v2997
        %v3049 = vmul.f32 %v2769, %v2999
        %v3050 = vmul.f32 %v2774, %v3001
        %v3051 = vmul.f32 %v2777, %v3003
        %v3052 = vmul.f32 %v2782, %v3005
        %v3053 = vmul.f32 %v2785, %v3007
        %v3054 = vmul.f32 %v2790, %v3009
        %v3055 = vmul.f32 %v2793, %v3011
        %v3056 = vmul.f32 %v2798, %v3013
        %v3057 = vmul.f32 %v2801, %v3015
        %v3058 = vmul.f32 %v2806, %v3017
        %v3059 = vmul.f32 %v2809, %v3019
        %v3060 = vmul.f32 %v2814, %v3021
        %v3061 = vmul.f32 %v2817, %v3023
        %v3062 = vmul.f32 %v2822, %v3025
        %v3063 = vmul.f32 %v2825, %v3027
        %v3064 = vmul.f32 %v2830, %v3029
        %v3065 = vmul.f32 %v2833, %v3031
        %v3066 = vmul.f32 %v2838, %v3033
        %v3067 = vmul.f32 %v2841, %v3035
        %vm3068 = vcmask 523264
        %3069 = vst.msk [vmem:[%s231] sm:$0xff] %vm3068, %v3036
        %3070 = vst.msk [vmem:[%s231 + $0x8] sm:$0xff] %vm3068, %v3037
        %3071 = vst.msk [vmem:[%s231 + $0x10] sm:$0xff] %vm3068, %v3038
        %3072 = vst.msk [vmem:[%s231 + $0x18] sm:$0xff] %vm3068, %v3039
        %3073 = vst.msk [vmem:[%s231 + $0x20] sm:$0xff] %vm3068, %v3040
        %3074 = vst.msk [vmem:[%s231 + $0x28] sm:$0xff] %vm3068, %v3041
        %3075 = vst.msk [vmem:[%s231 + $0x30] sm:$0xff] %vm3068, %v3042
        %3076 = vst.msk [vmem:[%s231 + $0x38] sm:$0xff] %vm3068, %v3043
        %3077 = vst.msk [vmem:[%s231 + $0x40] sm:$0xff] %vm3068, %v3044
        %3078 = vst.msk [vmem:[%s231 + $0x48] sm:$0xff] %vm3068, %v3045
        %3079 = vst.msk [vmem:[%s231 + $0x50] sm:$0xff] %vm3068, %v3046
        %3080 = vst.msk [vmem:[%s231 + $0x58] sm:$0xff] %vm3068, %v3047
        %3081 = vst.msk [vmem:[%s231 + $0x60] sm:$0xff] %vm3068, %v3048
        %3082 = vst.msk [vmem:[%s231 + $0x68] sm:$0xff] %vm3068, %v3049
        %3083 = vst.msk [vmem:[%s231 + $0x70] sm:$0xff] %vm3068, %v3050
        %3084 = vst.msk [vmem:[%s231 + $0x78] sm:$0xff] %vm3068, %v3051
        %3085 = vst.msk [vmem:[%s231 + $0x80] sm:$0xff] %vm3068, %v3052
        %3086 = vst.msk [vmem:[%s231 + $0x88] sm:$0xff] %vm3068, %v3053
        %3087 = vst.msk [vmem:[%s231 + $0x90] sm:$0xff] %vm3068, %v3054
        %3088 = vst.msk [vmem:[%s231 + $0x98] sm:$0xff] %vm3068, %v3055
        %3089 = vst.msk [vmem:[%s231 + $0xa0] sm:$0xff] %vm3068, %v3056
        %3090 = vst.msk [vmem:[%s231 + $0xa8] sm:$0xff] %vm3068, %v3057
        %3091 = vst.msk [vmem:[%s231 + $0xb0] sm:$0xff] %vm3068, %v3058
        %3092 = vst.msk [vmem:[%s231 + $0xb8] sm:$0xff] %vm3068, %v3059
        %3093 = vst.msk [vmem:[%s231 + $0xc0] sm:$0xff] %vm3068, %v3060
        %3094 = vst.msk [vmem:[%s231 + $0xc8] sm:$0xff] %vm3068, %v3061
        %3095 = vst.msk [vmem:[%s231 + $0xd0] sm:$0xff] %vm3068, %v3062
        %3096 = vst.msk [vmem:[%s231 + $0xd8] sm:$0xff] %vm3068, %v3063
        %3097 = vst.msk [vmem:[%s231 + $0xe0] sm:$0xff] %vm3068, %v3064
        %3098 = vst.msk [vmem:[%s231 + $0xe8] sm:$0xff] %vm3068, %v3065
        %3099 = vst.msk [vmem:[%s231 + $0xf0] sm:$0xff] %vm3068, %v3066
        %3100 = vst.msk [vmem:[%s231 + $0xf8] sm:$0xff] %vm3068, %v3067
        %s3101 = sand.u32 %s151, 1
        %s3102 = scalar_lea.sflag [#allocation3], %s3101
        %s3103 = sand.u32 %s151, 1
        %s3104 = smul.addr %s3103, 256
        %s3105 = scalar_lea.vmem [#allocation2], %s3104
        // Predicated region
        $region41: #{tpu_custom_call.1} parent=39 // pred_check
          %p3106 = pneg %p161
        $region42: #{tpu_custom_call.1} parent=39 // pred_check_branch
          %3108 = sbr.rel (%p3106) target = $region44
        $region43: #{tpu_custom_call.1} parent=39 // pred_region
          %s3109 = smul.u32 16, %s24
          %s3111 = ssub.s32 4096, 4096
          %3112 = vsyncadd %s3102, %s3111
          %s3113 = smul.addr %s3109, 2
          %s3114 = smul.addr %s23, 32
          %s3115 = sadd.s32 %s3113, %s3114
          %s3116 = smul.addr %s3115, 128
          %s3117 = scalar_lea.hbm %s5, %s3116
          %s3118 = sshll.u32 %s3105, 4
          %s3119 = int_to_ptr.vmem [resolvable:$true] %s3118
          %3124 = dma.vmem_to_hbm [thread:$0]  %s3119, 4096, %s3117, %s3102, 128, 128, 8
        $region44: #{tpu_custom_call.1} parent=39 // pred_fallthru
          _
      $region40: #{tpu_custom_call.1} parent=5 // pred_fallthru
        _
      %p3125 = scmp.le.s32.totalorder 2, %s14
      // Predicated region
      $region45: #{tpu_custom_call.1} parent=5 // pred_check
        %p3126 = pneg %p3125
      $region46: #{tpu_custom_call.1} parent=5 // pred_check_branch
        %3128 = sbr.rel (%p3126) target = $region48
      $region47: #{tpu_custom_call.1} parent=5 // pred_region
        %s3129 = ssub.s32 %s14, 2
        // Predicated region
        $region49: #{tpu_custom_call.1} parent=47 // pred_check
          %p3130 = pneg %p167
        $region50: #{tpu_custom_call.1} parent=47 // pred_check_branch
          %3132 = sbr.rel (%p3130) target = $region52
        $region51: #{tpu_custom_call.1} parent=47 // pred_region
          %s3133 = sand.u32 %s152, 1
          %s3134 = scalar_lea.sflag [#allocation3], %s3133
          %s3135 = sand.u32 %s152, 1
          %s3136 = smul.addr %s3135, 256
          %s3137 = scalar_lea.vmem [#allocation2], %s3136
          %3138 = dma.done %s3134, 4096
        $region52: #{tpu_custom_call.1} parent=47 // pred_fallthru
          _
      $region48: #{tpu_custom_call.1} parent=5 // pred_fallthru
        _
    $region6: #{tpu_custom_call.1} parent=1 // loop_footer
      %s18 = sadd.s32 1, %s14
    $region7: #{tpu_custom_call.1} parent=1 // loop_footer_branch
      %13 = sbr.rel target = $region3
    $region8: #{tpu_custom_call.1} parent=1 // loop_exit
      _
    %3139 = vsyncpa [#allocation3], 1
    %s3140 = scalar_lea.sflag [#allocation3], 1
    %3141 = vsyncpa %s3140, 1

</llo_original>
